<compile_context>
chip_gen: v5e
topology: v5e:2x2
jax: 0.10.0
libtpu: 0.0.40
codegen_flags: <defaults>
</compile_context>

<pallas_src>
import functools
import numpy as np
import jax
import jax.numpy as jnp
from jax.experimental import pallas as pl
from jax.experimental.pallas import tpu as pltpu

LANE = 128


def _round_up(x, m):
    return (x + m - 1) // m * m


def _pad_last(a, to):
    pad = to - a.shape[-1]
    if pad == 0:
        return a
    return jnp.pad(a, [(0, 0)] * (a.ndim - 1) + [(0, pad)])


# ----------------------------- Pallas kernel ------------------------------- #
def _tabnet_kernel(x_ref, wf_ref, bf_ref, wc_ref, bc_ref, ws_ref, bs_ref,
                   z_ref, c_ref, tab_ref, *, K, S, NCP):
    BBLK, T, F = x_ref.shape
    CP = wf_ref.shape[1]
    R = BBLK * T                                   # flattened rows per step

    # --- feature extractor: Conv2d(1->C, kernel=(F,1)) + ReLU == matmul ----
    x = x_ref[...].reshape(R, F)                                    # bf16
    z = jnp.dot(x, wf_ref[...], preferred_element_type=jnp.float32)
    z = jnp.maximum(z + bf_ref[...], 0.0)                           # f32 (R,CP)
    z3 = z.reshape(BBLK, T, CP)
    z_ref[...] = z3

    # --- causal context network: causal Conv1d(C->C, K) + ReLU -------------
    # Build the K-shift concat once (batched: one zero-pad + K static slices,
    # no cross-batch leak), then a single (R, K*CP) x (K*CP, CP) MXU matmul.
    zpad = jnp.concatenate(
        [jnp.zeros((BBLK, K - 1, CP), jnp.float32), z3], axis=1)    # (B,T+K-1,CP)
    zcat = jnp.concatenate([zpad[:, k:k + T, :] for k in range(K)], axis=2)
    zcat = zcat.reshape(R, K * CP).astype(jnp.bfloat16)             # (R,K*CP)

    c = jnp.dot(zcat, wc_ref[...], preferred_element_type=jnp.float32)
    c = jnp.maximum(c + bc_ref[...], 0.0)                           # f32 (R,CP)
    c_ref[...] = c.reshape(BBLK, T, CP)

    # --- fused per-string FCStringBlock: one Linear(C -> S*128) + softmax --
    logits = jnp.dot(c.astype(jnp.bfloat16), ws_ref[...],
                     preferred_element_type=jnp.float32)
    logits = logits + bs_ref[...]                                   # (R,S*NCP)

    probs = []
    for s in range(S):                       # static, 128-lane-aligned slices
        seg = logits[:, s * NCP:(s + 1) * NCP]                      # (R,128)
        m = jnp.max(seg, axis=-1, keepdims=True)
        e = jnp.exp(seg - m)                 # padded lanes: bias -1e30 -> 0
        denom = jnp.sum(e, axis=-1, keepdims=True)
        probs.append(e * pl.reciprocal(denom, approx=True))
    tab_ref[...] = jnp.concatenate(probs, axis=-1).reshape(BBLK, T, S * NCP)


# ------------------------------- wrapper ------------------------------------ #
def tabnet_forward(x_nchw, params, *, num_strings, bblk=None,
                   return_logits=False):
    """x_nchw: (B, 1, F, T) float32 spectrogram (PyTorch NCHW convention)."""
    # TODO(synk): return_logits=True (skip softmax) path is not implemented.
    wf, bf, wc, bc, ws, bs = (params["wf"], params["bf"], params["wc"],
                              params["bc"], params["ws"], params["bs"])
    B, _, F, T = x_nchw.shape
    C = wf.shape[1]
    K = wc.shape[0]
    S, _, NC = ws.shape
    assert S == num_strings

    CP = _round_up(C, LANE)          # lane-dense channel dim
    NCP = _round_up(NC, LANE)        # lane-dense per-string class dim

    if bblk is None:                 # batch elements per grid step
        bblk = 2 if (B % 2 == 0 and B >= 4) else 1
    assert B % bblk == 0

    # glue: NCHW (B,1,F,T) -> (B,T,F); bf16 operands for the MXU.
    x_btf = jnp.transpose(x_nchw[:, 0], (0, 2, 1)).astype(jnp.bfloat16)

    wf_p = _pad_last(wf, CP).astype(jnp.bfloat16)                   # (F,CP)
    bf_p = _pad_last(bf, CP).astype(jnp.float32)                    # (1,CP)

    wc_p = _pad_last(wc, CP)                                        # (K,C,CP)
    wc_p = jnp.pad(wc_p, ((0, 0), (0, CP - C), (0, 0)))             # (K,CP,CP)
    wc_f = wc_p.reshape(K * CP, CP).astype(jnp.bfloat16)            # (K*CP,CP)
    bc_p = _pad_last(bc, CP).astype(jnp.float32)                    # (1,CP)

    ws_p = _pad_last(ws, NCP)                                       # (S,C,NCP)
    ws_p = jnp.pad(ws_p, ((0, 0), (0, CP - C), (0, 0)))             # (S,CP,NCP)
    ws_f = jnp.transpose(ws_p, (1, 0, 2)).reshape(CP, S * NCP)
    ws_f = ws_f.astype(jnp.bfloat16)                                # (CP,S*NCP)
    bs_f = jnp.concatenate(
        [bs.astype(jnp.float32),
         jnp.full((S, NCP - NC), -1e30, jnp.float32)],              # pad lanes
        axis=-1).reshape(1, S * NCP)

    kernel = functools.partial(_tabnet_kernel, K=K, S=S, NCP=NCP)
    z_p, c_p, tab_f = pl.pallas_call(
        kernel,
        out_shape=(
            jax.ShapeDtypeStruct((B, T, CP), jnp.float32),          # z padded
            jax.ShapeDtypeStruct((B, T, CP), jnp.float32),          # c padded
            jax.ShapeDtypeStruct((B, T, S * NCP), jnp.float32),     # tab probs
        ),
        grid=(B // bblk,),
        in_specs=[
            pl.BlockSpec((bblk, T, F), lambda b: (b, 0, 0)),        # x
            pl.BlockSpec((F, CP), lambda b: (0, 0)),                # wf
            pl.BlockSpec((1, CP), lambda b: (0, 0)),                # bf
            pl.BlockSpec((K * CP, CP), lambda b: (0, 0)),           # wc fused
            pl.BlockSpec((1, CP), lambda b: (0, 0)),                # bc
            pl.BlockSpec((CP, S * NCP), lambda b: (0, 0)),          # ws fused
            pl.BlockSpec((1, S * NCP), lambda b: (0, 0)),           # bs fused
        ],
        out_specs=[
            pl.BlockSpec((bblk, T, CP), lambda b: (b, 0, 0)),
            pl.BlockSpec((bblk, T, CP), lambda b: (b, 0, 0)),
            pl.BlockSpec((bblk, T, S * NCP), lambda b: (b, 0, 0)),
        ],
        compiler_params=pltpu.CompilerParams(
            dimension_semantics=("parallel",)),
    )(x_btf, wf_p, bf_p, wc_f, bc_p, ws_f, bs_f)

    # Un-pad / re-layout in plain XLA (cheap one-time glue).
    z = z_p[..., :C]                                                # (B,T,C)
    c = c_p[..., :C]                                                # (B,T,C)
    tab = tab_f.reshape(B, T, S, NCP)[..., :NC].transpose(0, 2, 1, 3)

    # Assemble the same output dict structure as the PyTorch forward.
    return {
        "features": z,          # feature extractor output (B, T, C)
        "z": z,                 # (B, T, C)
        "masked_z": None,       # time_masking disabled
        "mask_indices": None,
        "c": c,                 # context network output (B, T, C)
        "o": c,                 # projection is None -> o = c
        "y": z,                 # projection is None -> y = z
        "notes": None,          # predict_notes = False
        "tab": tab,             # (B, S, T, NC), softmax over NC
    }


# ------------------------- pure-JAX reference ------------------------------- #
def _reference(x_nchw, params):
    """Mirrors the kernel's bf16-operand / f32-accumulate numerics."""
    wf, bf, wc, bc, ws, bs = (params["wf"], params["bf"], params["wc"],
                              params["bc"], params["ws"], params["bs"])
    K = wc.shape[0]
    x = jnp.transpose(x_nchw[:, 0], (0, 2, 1)).astype(jnp.bfloat16)  # (B,T,F)
    wf16, wc16, ws16 = (wf.astype(jnp.bfloat16), wc.astype(jnp.bfloat16),
                        ws.astype(jnp.bfloat16))
    z = jnp.einsum("btf,fc->btc", x, wf16,
                   preferred_element_type=jnp.float32) + bf
    z = jnp.maximum(z, 0.0)                                          # (B,T,C)
    T = z.shape[1]
    z16 = z.astype(jnp.bfloat16)
    zpad = jnp.pad(z16, ((0, 0), (K - 1, 0), (0, 0)))
    acc = jnp.broadcast_to(bc, z.shape).astype(jnp.float32)
    for k in range(K):
        acc = acc + jnp.einsum("btc,cd->btd", zpad[:, k:k + T], wc16[k],
                               preferred_element_type=jnp.float32)
    c = jnp.maximum(acc, 0.0)                                        # (B,T,C)
    c16 = c.astype(jnp.bfloat16)
    logits = jnp.einsum("btc,scn->bstn", c16, ws16,
                        preferred_element_type=jnp.float32)
    logits = logits + bs[None, :, None, :]
    return z, c, jax.nn.softmax(logits, axis=-1)


# --------------------------------- main ------------------------------------- #
if __name__ == "__main__":
    # small shapes: batch=4, freq bins=32, time frames=16, hidden=32,
    # causal kernel=3, strings=6, fret classes=21
    B, F, T, C, K, S, NC = 4, 32, 16, 32, 3, 6, 21

    key = jax.random.PRNGKey(0)
    kx, kwf, kbf, kwc, kbc, kws, kbs = jax.random.split(key, 7)

    x = jax.random.normal(kx, (B, 1, F, T), dtype=jnp.float32)       # NCHW

    params = {
        "wf": 0.1 * jax.random.normal(kwf, (F, C), dtype=jnp.float32),
        "bf": 0.1 * jax.random.normal(kbf, (1, C), dtype=jnp.float32),
        "wc": 0.1 * jax.random.normal(kwc, (K, C, C), dtype=jnp.float32),
        "bc": 0.1 * jax.random.normal(kbc, (1, C), dtype=jnp.float32),
        "ws": 0.5 * jax.random.normal(kws, (S, C, NC), dtype=jnp.float32),
        "bs": 0.1 * jax.random.normal(kbs, (S, NC), dtype=jnp.float32),
    }

    out = tabnet_forward(x, params, num_strings=S)
    jax.block_until_ready(out["tab"])

    z_ref, c_ref, tab_ref = _reference(x, params)
    # z / c: identical bf16 operands, f32 accumulation -> tight tolerance.
    np.testing.assert_allclose(np.asarray(out["z"]), np.asarray(z_ref),
                               rtol=1e-4, atol=1e-4)
    np.testing.assert_allclose(np.asarray(out["c"]), np.asarray(c_ref),
                               rtol=1e-4, atol=1e-4)
    # tab: kernel uses EUP approx-reciprocal for the softmax denominator.
    np.testing.assert_allclose(np.asarray(out["tab"]), np.asarray(tab_ref),
                               rtol=5e-3, atol=5e-3)

    print("KERNEL_OK")
</pallas_src>

<mosaic_0001>
module attributes {stable_mosaic.version = 11 : i64} {
  func.func @_tabnet_kernel(%arg0: i32, %arg1: memref<2x16x32xbf16, #tpu.memory_space<vmem>>, %arg2: memref<32x128xbf16, #tpu.memory_space<vmem>>, %arg3: memref<1x128xf32, #tpu.memory_space<vmem>>, %arg4: memref<384x128xbf16, #tpu.memory_space<vmem>>, %arg5: memref<1x128xf32, #tpu.memory_space<vmem>>, %arg6: memref<128x768xbf16, #tpu.memory_space<vmem>>, %arg7: memref<1x768xf32, #tpu.memory_space<vmem>>, %arg8: memref<2x16x128xf32, #tpu.memory_space<vmem>>, %arg9: memref<2x16x128xf32, #tpu.memory_space<vmem>>, %arg10: memref<2x16x768xf32, #tpu.memory_space<vmem>>) attributes {dimension_semantics = [#tpu.dimension_semantics<parallel>], iteration_bounds = array<i64: 2>, scalar_prefetch = 0 : i64, scratch_operands = 0 : i64, tpu.core_type = #tpu.core_type<tc>, window_params = [{transform_indices = @transform_0, window_bounds = array<i64: 2, 16, 32>}, {pipeline_mode = #tpu.pipeline_mode<synchronous>, transform_indices = @transform_1, window_bounds = array<i64: 32, 128>}, {pipeline_mode = #tpu.pipeline_mode<synchronous>, transform_indices = @transform_2, window_bounds = array<i64: 1, 128>}, {pipeline_mode = #tpu.pipeline_mode<synchronous>, transform_indices = @transform_3, window_bounds = array<i64: 384, 128>}, {pipeline_mode = #tpu.pipeline_mode<synchronous>, transform_indices = @transform_4, window_bounds = array<i64: 1, 128>}, {pipeline_mode = #tpu.pipeline_mode<synchronous>, transform_indices = @transform_5, window_bounds = array<i64: 128, 768>}, {pipeline_mode = #tpu.pipeline_mode<synchronous>, transform_indices = @transform_6, window_bounds = array<i64: 1, 768>}, {transform_indices = @transform_7, window_bounds = array<i64: 2, 16, 128>}, {transform_indices = @transform_8, window_bounds = array<i64: 2, 16, 128>}, {transform_indices = @transform_9, window_bounds = array<i64: 2, 16, 768>}]} {
    %c0 = arith.constant 0 : index
    %c0_0 = arith.constant 0 : index
    %c0_1 = arith.constant 0 : index
    %0 = vector.load %arg1[%c0, %c0_0, %c0_1] : memref<2x16x32xbf16, #tpu.memory_space<vmem>>, vector<2x16x32xbf16>
    %1 = vector.shape_cast %0 : vector<2x16x32xbf16> to vector<32x32xbf16>
    %c0_2 = arith.constant 0 : index
    %c0_3 = arith.constant 0 : index
    %2 = vector.load %arg2[%c0_2, %c0_3] : memref<32x128xbf16, #tpu.memory_space<vmem>>, vector<32x128xbf16>
    %cst = arith.constant dense<0.000000e+00> : vector<32x128xf32>
    %3 = tpu.matmul %1, %2, %cst {dimension_numbers = #tpu.dot_dimension_numbers<[1], [0], [0], [1], [0, 0, 1, 1], [], []>} : vector<32x32xbf16>, vector<32x128xbf16>, vector<32x128xf32> -> vector<32x128xf32>
    %c0_4 = arith.constant 0 : index
    %c0_5 = arith.constant 0 : index
    %4 = vector.load %arg3[%c0_4, %c0_5] : memref<1x128xf32, #tpu.memory_space<vmem>>, vector<1x128xf32>
    %5 = vector.broadcast %4 : vector<1x128xf32> to vector<32x128xf32>
    %6 = arith.addf %3, %5 : vector<32x128xf32>
    %cst_6 = arith.constant 0.000000e+00 : f32
    %7 = vector.broadcast %cst_6 : f32 to vector<32x128xf32>
    %8 = arith.maximumf %6, %7 : vector<32x128xf32>
    %9 = vector.shape_cast %8 : vector<32x128xf32> to vector<2x16x128xf32>
    %c0_7 = arith.constant 0 : index
    %c0_8 = arith.constant 0 : index
    %c0_9 = arith.constant 0 : index
    %10 = vector.load %arg8[%c0_7, %c0_8, %c0_9] : memref<2x16x128xf32, #tpu.memory_space<vmem>>, vector<2x16x128xf32>
    tpu.vector_store %arg8[%c0_7, %c0_8, %c0_9], %9 {strides = array<i32>} : memref<2x16x128xf32, #tpu.memory_space<vmem>>, vector<2x16x128xf32>,
    %cst_10 = arith.constant 0.000000e+00 : f32
    %11 = vector.broadcast %cst_10 : f32 to vector<2x2x128xf32>
    %12 = tpu.concatenate %11, %9 in 1 : vector<2x2x128xf32>, vector<2x16x128xf32> -> vector<2x18x128xf32>
    %13 = vector.extract_strided_slice %12 {offsets = [0, 0, 0], sizes = [2, 16, 128], strides = [1, 1, 1]} : vector<2x18x128xf32> to vector<2x16x128xf32>
    %14 = vector.extract_strided_slice %12 {offsets = [0, 1, 0], sizes = [2, 16, 128], strides = [1, 1, 1]} : vector<2x18x128xf32> to vector<2x16x128xf32>
    %15 = vector.extract_strided_slice %12 {offsets = [0, 2, 0], sizes = [2, 16, 128], strides = [1, 1, 1]} : vector<2x18x128xf32> to vector<2x16x128xf32>
    %16 = tpu.concatenate %13, %14, %15 in 2 : vector<2x16x128xf32>, vector<2x16x128xf32>, vector<2x16x128xf32> -> vector<2x16x384xf32>
    %17 = vector.shape_cast %16 : vector<2x16x384xf32> to vector<32x384xf32>
    %18 = arith.truncf %17 : vector<32x384xf32> to vector<32x384xbf16>
    %c0_11 = arith.constant 0 : index
    %c0_12 = arith.constant 0 : index
    %19 = vector.load %arg4[%c0_11, %c0_12] : memref<384x128xbf16, #tpu.memory_space<vmem>>, vector<384x128xbf16>
    %cst_13 = arith.constant dense<0.000000e+00> : vector<32x128xf32>
    %20 = tpu.matmul %18, %19, %cst_13 {dimension_numbers = #tpu.dot_dimension_numbers<[1], [0], [0], [1], [0, 0, 1, 1], [], []>} : vector<32x384xbf16>, vector<384x128xbf16>, vector<32x128xf32> -> vector<32x128xf32>
    %c0_14 = arith.constant 0 : index
    %c0_15 = arith.constant 0 : index
    %21 = vector.load %arg5[%c0_14, %c0_15] : memref<1x128xf32, #tpu.memory_space<vmem>>, vector<1x128xf32>
    %22 = vector.broadcast %21 : vector<1x128xf32> to vector<32x128xf32>
    %23 = arith.addf %20, %22 : vector<32x128xf32>
    %cst_16 = arith.constant 0.000000e+00 : f32
    %24 = vector.broadcast %cst_16 : f32 to vector<32x128xf32>
    %25 = arith.maximumf %23, %24 : vector<32x128xf32>
    %26 = vector.shape_cast %25 : vector<32x128xf32> to vector<2x16x128xf32>
    %c0_17 = arith.constant 0 : index
    %c0_18 = arith.constant 0 : index
    %c0_19 = arith.constant 0 : index
    %27 = vector.load %arg9[%c0_17, %c0_18, %c0_19] : memref<2x16x128xf32, #tpu.memory_space<vmem>>, vector<2x16x128xf32>
    tpu.vector_store %arg9[%c0_17, %c0_18, %c0_19], %26 {strides = array<i32>} : memref<2x16x128xf32, #tpu.memory_space<vmem>>, vector<2x16x128xf32>,
    %28 = arith.truncf %25 : vector<32x128xf32> to vector<32x128xbf16>
    %c0_20 = arith.constant 0 : index
    %c0_21 = arith.constant 0 : index
    %29 = vector.load %arg6[%c0_20, %c0_21] : memref<128x768xbf16, #tpu.memory_space<vmem>>, vector<128x768xbf16>
    %cst_22 = arith.constant dense<0.000000e+00> : vector<32x768xf32>
    %30 = tpu.matmul %28, %29, %cst_22 {dimension_numbers = #tpu.dot_dimension_numbers<[1], [0], [0], [1], [0, 0, 1, 1], [], []>} : vector<32x128xbf16>, vector<128x768xbf16>, vector<32x768xf32> -> vector<32x768xf32>
    %c0_23 = arith.constant 0 : index
    %c0_24 = arith.constant 0 : index
    %31 = vector.load %arg7[%c0_23, %c0_24] : memref<1x768xf32, #tpu.memory_space<vmem>>, vector<1x768xf32>
    %32 = vector.broadcast %31 : vector<1x768xf32> to vector<32x768xf32>
    %33 = arith.addf %30, %32 : vector<32x768xf32>
    %34 = vector.extract_strided_slice %33 {offsets = [0, 0], sizes = [32, 128], strides = [1, 1]} : vector<32x768xf32> to vector<32x128xf32>
    %cst_25 = arith.constant dense<0xFF800000> : vector<32xf32>
    %35 = vector.multi_reduction <maximumf>, %34, %cst_25 [1] : vector<32x128xf32> to vector<32xf32>
    %36 = vector.shape_cast %35 : vector<32xf32> to vector<32x1xf32>
    %37 = vector.broadcast %36 : vector<32x1xf32> to vector<32x128xf32>
    %38 = arith.subf %34, %37 : vector<32x128xf32>
    %39 = math.exp %38 : vector<32x128xf32>
    %cst_26 = arith.constant dense<0.000000e+00> : vector<32xf32>
    %40 = vector.multi_reduction <add>, %39, %cst_26 [1] : vector<32x128xf32> to vector<32xf32>
    %41 = vector.shape_cast %40 : vector<32xf32> to vector<32x1xf32>
    %42 = tpu.reciprocal %41 {approx = true} : vector<32x1xf32> -> vector<32x1xf32>
    %43 = vector.broadcast %42 : vector<32x1xf32> to vector<32x128xf32>
    %44 = arith.mulf %39, %43 : vector<32x128xf32>
    %45 = vector.extract_strided_slice %33 {offsets = [0, 128], sizes = [32, 128], strides = [1, 1]} : vector<32x768xf32> to vector<32x128xf32>
    %cst_27 = arith.constant dense<0xFF800000> : vector<32xf32>
    %46 = vector.multi_reduction <maximumf>, %45, %cst_27 [1] : vector<32x128xf32> to vector<32xf32>
    %47 = vector.shape_cast %46 : vector<32xf32> to vector<32x1xf32>
    %48 = vector.broadcast %47 : vector<32x1xf32> to vector<32x128xf32>
    %49 = arith.subf %45, %48 : vector<32x128xf32>
    %50 = math.exp %49 : vector<32x128xf32>
    %cst_28 = arith.constant dense<0.000000e+00> : vector<32xf32>
    %51 = vector.multi_reduction <add>, %50, %cst_28 [1] : vector<32x128xf32> to vector<32xf32>
    %52 = vector.shape_cast %51 : vector<32xf32> to vector<32x1xf32>
    %53 = tpu.reciprocal %52 {approx = true} : vector<32x1xf32> -> vector<32x1xf32>
    %54 = vector.broadcast %53 : vector<32x1xf32> to vector<32x128xf32>
    %55 = arith.mulf %50, %54 : vector<32x128xf32>
    %56 = vector.extract_strided_slice %33 {offsets = [0, 256], sizes = [32, 128], strides = [1, 1]} : vector<32x768xf32> to vector<32x128xf32>
    %cst_29 = arith.constant dense<0xFF800000> : vector<32xf32>
    %57 = vector.multi_reduction <maximumf>, %56, %cst_29 [1] : vector<32x128xf32> to vector<32xf32>
    %58 = vector.shape_cast %57 : vector<32xf32> to vector<32x1xf32>
    %59 = vector.broadcast %58 : vector<32x1xf32> to vector<32x128xf32>
    %60 = arith.subf %56, %59 : vector<32x128xf32>
    %61 = math.exp %60 : vector<32x128xf32>
    %cst_30 = arith.constant dense<0.000000e+00> : vector<32xf32>
    %62 = vector.multi_reduction <add>, %61, %cst_30 [1] : vector<32x128xf32> to vector<32xf32>
    %63 = vector.shape_cast %62 : vector<32xf32> to vector<32x1xf32>
    %64 = tpu.reciprocal %63 {approx = true} : vector<32x1xf32> -> vector<32x1xf32>
    %65 = vector.broadcast %64 : vector<32x1xf32> to vector<32x128xf32>
    %66 = arith.mulf %61, %65 : vector<32x128xf32>
    %67 = vector.extract_strided_slice %33 {offsets = [0, 384], sizes = [32, 128], strides = [1, 1]} : vector<32x768xf32> to vector<32x128xf32>
    %cst_31 = arith.constant dense<0xFF800000> : vector<32xf32>
    %68 = vector.multi_reduction <maximumf>, %67, %cst_31 [1] : vector<32x128xf32> to vector<32xf32>
    %69 = vector.shape_cast %68 : vector<32xf32> to vector<32x1xf32>
    %70 = vector.broadcast %69 : vector<32x1xf32> to vector<32x128xf32>
    %71 = arith.subf %67, %70 : vector<32x128xf32>
    %72 = math.exp %71 : vector<32x128xf32>
    %cst_32 = arith.constant dense<0.000000e+00> : vector<32xf32>
    %73 = vector.multi_reduction <add>, %72, %cst_32 [1] : vector<32x128xf32> to vector<32xf32>
    %74 = vector.shape_cast %73 : vector<32xf32> to vector<32x1xf32>
    %75 = tpu.reciprocal %74 {approx = true} : vector<32x1xf32> -> vector<32x1xf32>
    %76 = vector.broadcast %75 : vector<32x1xf32> to vector<32x128xf32>
    %77 = arith.mulf %72, %76 : vector<32x128xf32>
    %78 = vector.extract_strided_slice %33 {offsets = [0, 512], sizes = [32, 128], strides = [1, 1]} : vector<32x768xf32> to vector<32x128xf32>
    %cst_33 = arith.constant dense<0xFF800000> : vector<32xf32>
    %79 = vector.multi_reduction <maximumf>, %78, %cst_33 [1] : vector<32x128xf32> to vector<32xf32>
    %80 = vector.shape_cast %79 : vector<32xf32> to vector<32x1xf32>
    %81 = vector.broadcast %80 : vector<32x1xf32> to vector<32x128xf32>
    %82 = arith.subf %78, %81 : vector<32x128xf32>
    %83 = math.exp %82 : vector<32x128xf32>
    %cst_34 = arith.constant dense<0.000000e+00> : vector<32xf32>
    %84 = vector.multi_reduction <add>, %83, %cst_34 [1] : vector<32x128xf32> to vector<32xf32>
    %85 = vector.shape_cast %84 : vector<32xf32> to vector<32x1xf32>
    %86 = tpu.reciprocal %85 {approx = true} : vector<32x1xf32> -> vector<32x1xf32>
    %87 = vector.broadcast %86 : vector<32x1xf32> to vector<32x128xf32>
    %88 = arith.mulf %83, %87 : vector<32x128xf32>
    %89 = vector.extract_strided_slice %33 {offsets = [0, 640], sizes = [32, 128], strides = [1, 1]} : vector<32x768xf32> to vector<32x128xf32>
    %cst_35 = arith.constant dense<0xFF800000> : vector<32xf32>
    %90 = vector.multi_reduction <maximumf>, %89, %cst_35 [1] : vector<32x128xf32> to vector<32xf32>
    %91 = vector.shape_cast %90 : vector<32xf32> to vector<32x1xf32>
    %92 = vector.broadcast %91 : vector<32x1xf32> to vector<32x128xf32>
    %93 = arith.subf %89, %92 : vector<32x128xf32>
    %94 = math.exp %93 : vector<32x128xf32>
    %cst_36 = arith.constant dense<0.000000e+00> : vector<32xf32>
    %95 = vector.multi_reduction <add>, %94, %cst_36 [1] : vector<32x128xf32> to vector<32xf32>
    %96 = vector.shape_cast %95 : vector<32xf32> to vector<32x1xf32>
    %97 = tpu.reciprocal %96 {approx = true} : vector<32x1xf32> -> vector<32x1xf32>
    %98 = vector.broadcast %97 : vector<32x1xf32> to vector<32x128xf32>
    %99 = arith.mulf %94, %98 : vector<32x128xf32>
    %100 = tpu.concatenate %44, %55, %66, %77, %88, %99 in 1 : vector<32x128xf32>, vector<32x128xf32>, vector<32x128xf32>, vector<32x128xf32>, vector<32x128xf32>, vector<32x128xf32> -> vector<32x768xf32>
    %101 = vector.shape_cast %100 : vector<32x768xf32> to vector<2x16x768xf32>
    %c0_37 = arith.constant 0 : index
    %c0_38 = arith.constant 0 : index
    %c0_39 = arith.constant 0 : index
    %102 = vector.load %arg10[%c0_37, %c0_38, %c0_39] : memref<2x16x768xf32, #tpu.memory_space<vmem>>, vector<2x16x768xf32>
    tpu.vector_store %arg10[%c0_37, %c0_38, %c0_39], %101 {strides = array<i32>} : memref<2x16x768xf32, #tpu.memory_space<vmem>>, vector<2x16x768xf32>,
    return
  }
  func.func @transform_0(%arg0: i32) -> (i32, i32, i32) {
    %c0_i32 = arith.constant 0 : i32
    %c0_i32_0 = arith.constant 0 : i32
    %c0_i32_1 = arith.constant 0 : i32
    return %arg0, %c0_i32, %c0_i32_0 : i32, i32, i32
  }
  func.func @transform_1(%arg0: i32) -> (i32, i32) {
    %c0_i32 = arith.constant 0 : i32
    %c0_i32_0 = arith.constant 0 : i32
    %c0_i32_1 = arith.constant 0 : i32
    return %c0_i32, %c0_i32_0 : i32, i32
  }
  func.func @transform_2(%arg0: i32) -> (i32, i32) {
    %c0_i32 = arith.constant 0 : i32
    %c0_i32_0 = arith.constant 0 : i32
    %c0_i32_1 = arith.constant 0 : i32
    return %c0_i32, %c0_i32_0 : i32, i32
  }
  func.func @transform_3(%arg0: i32) -> (i32, i32) {
    %c0_i32 = arith.constant 0 : i32
    %c0_i32_0 = arith.constant 0 : i32
    %c0_i32_1 = arith.constant 0 : i32
    return %c0_i32, %c0_i32_0 : i32, i32
  }
  func.func @transform_4(%arg0: i32) -> (i32, i32) {
    %c0_i32 = arith.constant 0 : i32
    %c0_i32_0 = arith.constant 0 : i32
    %c0_i32_1 = arith.constant 0 : i32
    return %c0_i32, %c0_i32_0 : i32, i32
  }
  func.func @transform_5(%arg0: i32) -> (i32, i32) {
    %c0_i32 = arith.constant 0 : i32
    %c0_i32_0 = arith.constant 0 : i32
    %c0_i32_1 = arith.constant 0 : i32
    return %c0_i32, %c0_i32_0 : i32, i32
  }
  func.func @transform_6(%arg0: i32) -> (i32, i32) {
    %c0_i32 = arith.constant 0 : i32
    %c0_i32_0 = arith.constant 0 : i32
    %c0_i32_1 = arith.constant 0 : i32
    return %c0_i32, %c0_i32_0 : i32, i32
  }
  func.func @transform_7(%arg0: i32) -> (i32, i32, i32) {
    %c0_i32 = arith.constant 0 : i32
    %c0_i32_0 = arith.constant 0 : i32
    %c0_i32_1 = arith.constant 0 : i32
    return %arg0, %c0_i32, %c0_i32_0 : i32, i32, i32
  }
  func.func @transform_8(%arg0: i32) -> (i32, i32, i32) {
    %c0_i32 = arith.constant 0 : i32
    %c0_i32_0 = arith.constant 0 : i32
    %c0_i32_1 = arith.constant 0 : i32
    return %arg0, %c0_i32, %c0_i32_0 : i32, i32, i32
  }
  func.func @transform_9(%arg0: i32) -> (i32, i32, i32) {
    %c0_i32 = arith.constant 0 : i32
    %c0_i32_0 = arith.constant 0 : i32
    %c0_i32_1 = arith.constant 0 : i32
    return %arg0, %c0_i32, %c0_i32_0 : i32, i32, i32
  }
}

</mosaic_0001>

<llo_original>
// kernel: tpu_custom_call.1
$region0: #{tpu_custom_call.1}
  #allocation0 [shape = 'u32[]', space=smem, size = 0x4, offset = 0x4, fixed_abs, tag = 'smem constant byte address 0x4 - core index']
  #allocation1 [shape = 'u32[72,128]{1,0:T(1,128)}', space=vmem, size = 0x9000, scoped, tag = 'internal scratch']
  %s0 = inlined_call_operand.hbm [shape: bf16[4,16,32], index: 0, kind: input, shape index: {}]
  %s1 = inlined_call_operand.hbm [shape: bf16[32,128], index: 1, kind: input, shape index: {}]
  %s2 = inlined_call_operand.vmem [shape: f32[1,128], index: 2, kind: input, shape index: {}]
  %s3 = inlined_call_operand.hbm [shape: bf16[384,128], index: 3, kind: input, shape index: {}]
  %s4 = inlined_call_operand.vmem [shape: f32[1,128], index: 4, kind: input, shape index: {}]
  %s5 = inlined_call_operand.hbm [shape: bf16[128,768], index: 5, kind: input, shape index: {}]
  %s6 = inlined_call_operand.hbm [shape: f32[1,768], index: 6, kind: input, shape index: {}]
  %s7 = inlined_call_operand.hbm [shape: f32[4,16,128], index: 7, kind: output, shape index: {0}]
  %s8 = inlined_call_operand.hbm [shape: f32[4,16,128], index: 8, kind: output, shape index: {1}]
  %s9 = inlined_call_operand.hbm [shape: f32[4,16,768], index: 9, kind: output, shape index: {2}]
  %10 = xla_tuple %s7, %s8, %s9
  %s11 = sld [smem:[#allocation0]]
  $region97: #{tpu_custom_call.1} parent=0
    _
  %s13 = ssub.s32 1, %s11
  %s14 = scalar_select 0, %s13, %s11
  $region1: #{tpu_custom_call.1} parent=0
    #allocation2 [shape = 'u8[16384]{0}', space=vmem, size = 0x4000, scoped, tag = 'input window, operand 0']
    #allocation3 [shape = 's32[2]{0}', space=sflag, size = 0x8, scoped, tag = 'scoped memory for tpu_custom_call.1']
    #allocation4 [shape = 's32[2]{0}', space=sflag, size = 0x8, scoped, tag = 'scoped memory for tpu_custom_call.1']
    #allocation5 [shape = 'u8[8192]{0}', space=vmem, size = 0x2000, scoped, tag = 'input window, operand 1, single buffered']
    #allocation6 [shape = 's32[1]{0}', space=sflag, size = 0x4, scoped, tag = 'scoped memory for tpu_custom_call.1']
    #allocation7 [shape = 'u8[98304]{0}', space=vmem, size = 0x18000, scoped, tag = 'input window, operand 3, single buffered']
    #allocation8 [shape = 'u8[196608]{0}', space=vmem, size = 0x30000, scoped, tag = 'input window, operand 5, single buffered']
    #allocation9 [shape = 's32[1]{0}', space=sflag, size = 0x4, scoped, tag = 'scoped memory for tpu_custom_call.1']
    #allocation10 [shape = 'u8[3072]{0}', space=vmem, size = 0xc00, scoped, tag = 'input window, operand 6, single buffered']
    #allocation11 [shape = 'u8[32768]{0}', space=vmem, size = 0x8000, scoped, tag = 'output window, operand 0']
    #allocation12 [shape = 'u8[32768]{0}', space=vmem, size = 0x8000, scoped, tag = 'output window, operand 1']
    #allocation13 [shape = 's32[2]{0}', space=sflag, size = 0x8, scoped, tag = 'scoped memory for tpu_custom_call.1']
    #allocation14 [shape = 'u8[196608]{0}', space=vmem, size = 0x30000, scoped, tag = 'output window, operand 2']
    %15 = vsyncpa [#allocation3], 0
    %s16 = scalar_lea.sflag [#allocation3], 1
    %17 = vsyncpa %s16, 0
    %18 = vsyncpa [#allocation6], 0
    %19 = vsyncpa [#allocation9], 0
    %20 = vsyncpa [#allocation4], 0
    %s21 = scalar_lea.sflag [#allocation4], 1
    %22 = vsyncpa %s21, 0
    %23 = vsyncpa [#allocation13], 0
    %s24 = scalar_lea.sflag [#allocation13], 1
    %25 = vsyncpa %s24, 0
    loop: start=0, step=1, limit=4
    $region2: #{tpu_custom_call.1} parent=1 // loop_pre_header
      _
    $region3: #{tpu_custom_call.1} parent=1 // loop_header
      %s27 = sphi 0, %s31
      %p28 = scmp.ge.s32.totalorder %s27, 4
      %s37 = sphi 0, %s39
      %s40 = sphi 0, %s37
      %s41 = sphi 0, %s40
      %s57 = sphi 0, %s41
      %s61 = sphi 0, %s61
      %s63 = sphi 0, %s61
      %s64 = sphi 0, %s63
      %s78 = sphi 0, %s64
      %s82 = sphi 0, %s82
      %s84 = sphi 0, %s82
      %s85 = sphi 0, %s84
      %s99 = sphi 0, %s85
      %s103 = sphi 0, %s103
      %s105 = sphi 0, %s103
      %s106 = sphi 0, %s105
      %s120 = sphi 0, %s106
      %s124 = sphi 0, %s124
      %s126 = sphi 0, %s124
      %s127 = sphi 0, %s126
      %s141 = sphi 0, %s127
      %s145 = sphi 0, %s145
      %s147 = sphi 0, %s145
      %s148 = sphi 0, %s147
      %s162 = sphi 0, %s148
      %s166 = sphi 0, %s166
      %s168 = sphi 0, %s166
      %s169 = sphi 0, %s168
      %s183 = sphi 0, %s169
      %s189 = sphi 0, %s191
      %s192 = sphi 0, %s189
      %s193 = sphi 0, %s192
      %s209 = sphi 0, %s193
      %s215 = sphi 0, %s217
      %s218 = sphi 0, %s215
      %s219 = sphi 0, %s218
      %s235 = sphi 0, %s219
      %s241 = sphi 0, %s243
      %s244 = sphi 0, %s241
      %s245 = sphi 0, %s244
      %s261 = sphi 0, %s245
    $region4: #{tpu_custom_call.1} parent=1 // loop_header_branch
      %30 = sbr.rel (%p28) target = $region8
    $region5: #{tpu_custom_call.1} parent=1 // loop_body
      %s32 = ssub.s32 %s27, 1
      %s33 = ssub.s32 %s27, 2
      %s34 = sadd.s32 %s27, 1
      %s35 = ssub.s32 %s27, %s34
      %p36 = scmp.eq.s32.totalorder %s35, 0
      %s38 = sadd.s32 %s37, 1
      %s39 = scalar_select %p36, %s37, %s38
      %p42 = pneg %p36
      %p43 = scmp.eq.s32.totalorder %s27, 1
      %p44 = por %p42, %p43
      %p45 = scmp.ne.s32.totalorder %s37, %s40
      %p46 = scmp.eq.s32.totalorder %s27, 0
      %p47 = por %p45, %p46
      %p48 = scmp.ne.s32.totalorder %s37, %s40
      %p49 = scmp.eq.s32.totalorder %s32, 1
      %p50 = por %p48, %p49
      %p51 = scmp.ne.s32.totalorder %s40, %s41
      %p52 = scmp.eq.s32.totalorder %s32, 0
      %p53 = por %p51, %p52
      %p54 = scmp.ne.s32.totalorder %s40, %s41
      %p55 = scmp.eq.s32.totalorder %s33, 1
      %p56 = por %p54, %p55
      %p58 = scmp.ne.s32.totalorder %s41, %s57
      %p59 = scmp.eq.s32.totalorder %s33, 0
      %p60 = por %p58, %p59
      %s62 = sadd.s32 %s61, 1
      %p65 = scmp.eq.s32.totalorder %s27, 1
      %p66 = scmp.ne.s32.totalorder %s61, %s63
      %p67 = scmp.eq.s32.totalorder %s27, 0
      %p68 = por %p66, %p67
      %p69 = scmp.ne.s32.totalorder %s61, %s63
      %p70 = scmp.eq.s32.totalorder %s32, 1
      %p71 = por %p69, %p70
      %p72 = scmp.ne.s32.totalorder %s63, %s64
      %p73 = scmp.eq.s32.totalorder %s32, 0
      %p74 = por %p72, %p73
      %p75 = scmp.ne.s32.totalorder %s63, %s64
      %p76 = scmp.eq.s32.totalorder %s33, 1
      %p77 = por %p75, %p76
      %p79 = scmp.ne.s32.totalorder %s64, %s78
      %p80 = scmp.eq.s32.totalorder %s33, 0
      %p81 = por %p79, %p80
      %s83 = sadd.s32 %s82, 1
      %p86 = scmp.eq.s32.totalorder %s27, 1
      %p87 = scmp.ne.s32.totalorder %s82, %s84
      %p88 = scmp.eq.s32.totalorder %s27, 0
      %p89 = por %p87, %p88
      %p90 = scmp.ne.s32.totalorder %s82, %s84
      %p91 = scmp.eq.s32.totalorder %s32, 1
      %p92 = por %p90, %p91
      %p93 = scmp.ne.s32.totalorder %s84, %s85
      %p94 = scmp.eq.s32.totalorder %s32, 0
      %p95 = por %p93, %p94
      %p96 = scmp.ne.s32.totalorder %s84, %s85
      %p97 = scmp.eq.s32.totalorder %s33, 1
      %p98 = por %p96, %p97
      %p100 = scmp.ne.s32.totalorder %s85, %s99
      %p101 = scmp.eq.s32.totalorder %s33, 0
      %p102 = por %p100, %p101
      %s104 = sadd.s32 %s103, 1
      %p107 = scmp.eq.s32.totalorder %s27, 1
      %p108 = scmp.ne.s32.totalorder %s103, %s105
      %p109 = scmp.eq.s32.totalorder %s27, 0
      %p110 = por %p108, %p109
      %p111 = scmp.ne.s32.totalorder %s103, %s105
      %p112 = scmp.eq.s32.totalorder %s32, 1
      %p113 = por %p111, %p112
      %p114 = scmp.ne.s32.totalorder %s105, %s106
      %p115 = scmp.eq.s32.totalorder %s32, 0
      %p116 = por %p114, %p115
      %p117 = scmp.ne.s32.totalorder %s105, %s106
      %p118 = scmp.eq.s32.totalorder %s33, 1
      %p119 = por %p117, %p118
      %p121 = scmp.ne.s32.totalorder %s106, %s120
      %p122 = scmp.eq.s32.totalorder %s33, 0
      %p123 = por %p121, %p122
      %s125 = sadd.s32 %s124, 1
      %p128 = scmp.eq.s32.totalorder %s27, 1
      %p129 = scmp.ne.s32.totalorder %s124, %s126
      %p130 = scmp.eq.s32.totalorder %s27, 0
      %p131 = por %p129, %p130
      %p132 = scmp.ne.s32.totalorder %s124, %s126
      %p133 = scmp.eq.s32.totalorder %s32, 1
      %p134 = por %p132, %p133
      %p135 = scmp.ne.s32.totalorder %s126, %s127
      %p136 = scmp.eq.s32.totalorder %s32, 0
      %p137 = por %p135, %p136
      %p138 = scmp.ne.s32.totalorder %s126, %s127
      %p139 = scmp.eq.s32.totalorder %s33, 1
      %p140 = por %p138, %p139
      %p142 = scmp.ne.s32.totalorder %s127, %s141
      %p143 = scmp.eq.s32.totalorder %s33, 0
      %p144 = por %p142, %p143
      %s146 = sadd.s32 %s145, 1
      %p149 = scmp.eq.s32.totalorder %s27, 1
      %p150 = scmp.ne.s32.totalorder %s145, %s147
      %p151 = scmp.eq.s32.totalorder %s27, 0
      %p152 = por %p150, %p151
      %p153 = scmp.ne.s32.totalorder %s145, %s147
      %p154 = scmp.eq.s32.totalorder %s32, 1
      %p155 = por %p153, %p154
      %p156 = scmp.ne.s32.totalorder %s147, %s148
      %p157 = scmp.eq.s32.totalorder %s32, 0
      %p158 = por %p156, %p157
      %p159 = scmp.ne.s32.totalorder %s147, %s148
      %p160 = scmp.eq.s32.totalorder %s33, 1
      %p161 = por %p159, %p160
      %p163 = scmp.ne.s32.totalorder %s148, %s162
      %p164 = scmp.eq.s32.totalorder %s33, 0
      %p165 = por %p163, %p164
      %s167 = sadd.s32 %s166, 1
      %p170 = scmp.eq.s32.totalorder %s27, 1
      %p171 = scmp.ne.s32.totalorder %s166, %s168
      %p172 = scmp.eq.s32.totalorder %s27, 0
      %p173 = por %p171, %p172
      %p174 = scmp.ne.s32.totalorder %s166, %s168
      %p175 = scmp.eq.s32.totalorder %s32, 1
      %p176 = por %p174, %p175
      %p177 = scmp.ne.s32.totalorder %s168, %s169
      %p178 = scmp.eq.s32.totalorder %s32, 0
      %p179 = por %p177, %p178
      %p180 = scmp.ne.s32.totalorder %s168, %s169
      %p181 = scmp.eq.s32.totalorder %s33, 1
      %p182 = por %p180, %p181
      %p184 = scmp.ne.s32.totalorder %s169, %s183
      %p185 = scmp.eq.s32.totalorder %s33, 0
      %p186 = por %p184, %p185
      %s187 = ssub.s32 %s27, %s34
      %p188 = scmp.eq.s32.totalorder %s187, 0
      %s190 = sadd.s32 %s189, 1
      %s191 = scalar_select %p188, %s189, %s190
      %p194 = pneg %p188
      %p195 = scmp.eq.s32.totalorder %s27, 1
      %p196 = por %p194, %p195
      %p197 = scmp.ne.s32.totalorder %s189, %s192
      %p198 = scmp.eq.s32.totalorder %s27, 0
      %p199 = por %p197, %p198
      %p200 = scmp.ne.s32.totalorder %s189, %s192
      %p201 = scmp.eq.s32.totalorder %s32, 1
      %p202 = por %p200, %p201
      %p203 = scmp.ne.s32.totalorder %s192, %s193
      %p204 = scmp.eq.s32.totalorder %s32, 0
      %p205 = por %p203, %p204
      %p206 = scmp.ne.s32.totalorder %s192, %s193
      %p207 = scmp.eq.s32.totalorder %s33, 1
      %p208 = por %p206, %p207
      %p210 = scmp.ne.s32.totalorder %s193, %s209
      %p211 = scmp.eq.s32.totalorder %s33, 0
      %p212 = por %p210, %p211
      %s213 = ssub.s32 %s27, %s34
      %p214 = scmp.eq.s32.totalorder %s213, 0
      %s216 = sadd.s32 %s215, 1
      %s217 = scalar_select %p214, %s215, %s216
      %p220 = pneg %p214
      %p221 = scmp.eq.s32.totalorder %s27, 1
      %p222 = por %p220, %p221
      %p223 = scmp.ne.s32.totalorder %s215, %s218
      %p224 = scmp.eq.s32.totalorder %s27, 0
      %p225 = por %p223, %p224
      %p226 = scmp.ne.s32.totalorder %s215, %s218
      %p227 = scmp.eq.s32.totalorder %s32, 1
      %p228 = por %p226, %p227
      %p229 = scmp.ne.s32.totalorder %s218, %s219
      %p230 = scmp.eq.s32.totalorder %s32, 0
      %p231 = por %p229, %p230
      %p232 = scmp.ne.s32.totalorder %s218, %s219
      %p233 = scmp.eq.s32.totalorder %s33, 1
      %p234 = por %p232, %p233
      %p236 = scmp.ne.s32.totalorder %s219, %s235
      %p237 = scmp.eq.s32.totalorder %s33, 0
      %p238 = por %p236, %p237
      %s239 = ssub.s32 %s27, %s34
      %p240 = scmp.eq.s32.totalorder %s239, 0
      %s242 = sadd.s32 %s241, 1
      %s243 = scalar_select %p240, %s241, %s242
      %p246 = pneg %p240
      %p247 = scmp.eq.s32.totalorder %s27, 1
      %p248 = por %p246, %p247
      %p249 = scmp.ne.s32.totalorder %s241, %s244
      %p250 = scmp.eq.s32.totalorder %s27, 0
      %p251 = por %p249, %p250
      %p252 = scmp.ne.s32.totalorder %s241, %s244
      %p253 = scmp.eq.s32.totalorder %s32, 1
      %p254 = por %p252, %p253
      %p255 = scmp.ne.s32.totalorder %s244, %s245
      %p256 = scmp.eq.s32.totalorder %s32, 0
      %p257 = por %p255, %p256
      %p258 = scmp.ne.s32.totalorder %s244, %s245
      %p259 = scmp.eq.s32.totalorder %s33, 1
      %p260 = por %p258, %p259
      %p262 = scmp.ne.s32.totalorder %s245, %s261
      %p263 = scmp.eq.s32.totalorder %s33, 0
      %p264 = por %p262, %p263
      %p265 = scmp.le.s32.totalorder 1, %s27
      %p266 = scmp.lt.s32.totalorder %s27, 3
      %p267 = pnand %p265, %p266
      %p268 = pneg %p267
      // Predicated region
      $region9: #{tpu_custom_call.1} parent=5 // pred_check
        _
      $region10: #{tpu_custom_call.1} parent=5 // pred_check_branch
        %270 = sbr.rel (%p267) target = $region12
      $region11: #{tpu_custom_call.1} parent=5 // pred_region
        %s271 = ssub.s32 %s27, 1
        // Predicated region
        $region13: #{tpu_custom_call.1} parent=11 // pred_check
          %p272 = pneg %p74
        $region14: #{tpu_custom_call.1} parent=11 // pred_check_branch
          %274 = sbr.rel (%p272) target = $region16
        $region15: #{tpu_custom_call.1} parent=11 // pred_region
          %276 = vsyncadd [#allocation6], 0
          %s277 = sshll.u32 %s1, 4
          %s278 = int_to_ptr.hbm [resolvable:$true] %s277
          %s279 = sshll.u32 [#allocation5], 4
          %s280 = int_to_ptr.vmem [resolvable:$true] %s279
          %285 = dma.hbm_to_vmem [thread:$0]  %s278, 256, %s280, [#allocation6], 64, 64, 4
        $region16: #{tpu_custom_call.1} parent=11 // pred_fallthru
          _
        // Predicated region
        $region17: #{tpu_custom_call.1} parent=11 // pred_check
          %p286 = pneg %p95
        $region18: #{tpu_custom_call.1} parent=11 // pred_check_branch
          %288 = sbr.rel (%p286) target = $region20
        $region19: #{tpu_custom_call.1} parent=11 // pred_region
          _
        $region20: #{tpu_custom_call.1} parent=11 // pred_fallthru
          _
        // Predicated region
        $region21: #{tpu_custom_call.1} parent=11 // pred_check
          %p289 = pneg %p116
        $region22: #{tpu_custom_call.1} parent=11 // pred_check_branch
          %291 = sbr.rel (%p289) target = $region24
        $region23: #{tpu_custom_call.1} parent=11 // pred_region
          %293 = vsyncadd [#allocation6], 0
          %s294 = sshll.u32 %s3, 4
          %s295 = int_to_ptr.hbm [resolvable:$true] %s294
          %s296 = sshll.u32 [#allocation7], 4
          %s297 = int_to_ptr.vmem [resolvable:$true] %s296
          %302 = dma.hbm_to_vmem [thread:$0]  %s295, 3072, %s297, [#allocation6], 64, 64, 4
        $region24: #{tpu_custom_call.1} parent=11 // pred_fallthru
          _
        // Predicated region
        $region25: #{tpu_custom_call.1} parent=11 // pred_check
          %p303 = pneg %p137
        $region26: #{tpu_custom_call.1} parent=11 // pred_check_branch
          %305 = sbr.rel (%p303) target = $region28
        $region27: #{tpu_custom_call.1} parent=11 // pred_region
          _
        $region28: #{tpu_custom_call.1} parent=11 // pred_fallthru
          _
        // Predicated region
        $region29: #{tpu_custom_call.1} parent=11 // pred_check
          %p306 = pneg %p158
        $region30: #{tpu_custom_call.1} parent=11 // pred_check_branch
          %308 = sbr.rel (%p306) target = $region32
        $region31: #{tpu_custom_call.1} parent=11 // pred_region
          %310 = vsyncadd [#allocation9], 0
          %s311 = sshll.u32 %s5, 4
          %s312 = int_to_ptr.hbm [resolvable:$true] %s311
          %s313 = sshll.u32 [#allocation8], 4
          %s314 = int_to_ptr.vmem [resolvable:$true] %s313
          %319 = dma.hbm_to_vmem [thread:$0]  %s312, 6144, %s314, [#allocation9], 384, 384, 24
        $region32: #{tpu_custom_call.1} parent=11 // pred_fallthru
          _
        // Predicated region
        $region33: #{tpu_custom_call.1} parent=11 // pred_check
          %p320 = pneg %p179
        $region34: #{tpu_custom_call.1} parent=11 // pred_check_branch
          %322 = sbr.rel (%p320) target = $region36
        $region35: #{tpu_custom_call.1} parent=11 // pred_region
          %324 = vsyncadd [#allocation9], 0
          %s326 = sshll.u32 %s6, 4
          %s327 = int_to_ptr.hbm [resolvable:$true] %s326
          %s328 = sshll.u32 [#allocation10], 4
          %s329 = int_to_ptr.vmem [resolvable:$true] %s328
          %331 = dma.hbm_to_vmem [thread:$0]  %s327, 96, %s329, [#allocation9]
        $region36: #{tpu_custom_call.1} parent=11 // pred_fallthru
          _
      $region12: #{tpu_custom_call.1} parent=5 // pred_fallthru
        _
      %p332 = scmp.lt.s32.totalorder %s27, 2
      // Predicated region
      $region37: #{tpu_custom_call.1} parent=5 // pred_check
        %p333 = pneg %p332
      $region38: #{tpu_custom_call.1} parent=5 // pred_check_branch
        %335 = sbr.rel (%p333) target = $region40
      $region39: #{tpu_custom_call.1} parent=5 // pred_region
        // Predicated region
        $region41: #{tpu_custom_call.1} parent=39 // pred_check
          %p336 = pneg %p47
        $region42: #{tpu_custom_call.1} parent=39 // pred_check_branch
          %338 = sbr.rel (%p336) target = $region44
        $region43: #{tpu_custom_call.1} parent=39 // pred_region
          %s339 = sand.u32 %s37, 1
          %s340 = scalar_lea.sflag [#allocation3], %s339
          %s341 = sand.u32 %s37, 1
          %s342 = smul.addr %s341, 16
          %s343 = scalar_lea.vmem [#allocation2], %s342
          %s344 = smul.u32 2, %s27
          %346 = vsyncadd %s340, 0
          %s347 = smul.addr %s344, 2
          %s348 = smul.addr %s347, 4
          %s349 = scalar_lea.hbm %s0, %s348
          %s350 = sshll.u32 %s349, 4
          %s351 = int_to_ptr.hbm [resolvable:$true] %s350
          %s352 = sshll.u32 %s343, 4
          %s353 = int_to_ptr.vmem [resolvable:$true] %s352
          %358 = dma.hbm_to_vmem [thread:$0]  %s351, 256, %s353, %s340, 64, 64, 4
        $region44: #{tpu_custom_call.1} parent=39 // pred_fallthru
          _
      $region40: #{tpu_custom_call.1} parent=5 // pred_fallthru
        _
      %p359 = scmp.le.s32.totalorder 1, %s27
      %p360 = scmp.lt.s32.totalorder %s27, 3
      %p361 = pnand %p359, %p360
      %p362 = pneg %p361
      // Predicated region
      $region45: #{tpu_custom_call.1} parent=5 // pred_check
        _
      $region46: #{tpu_custom_call.1} parent=5 // pred_check_branch
        %364 = sbr.rel (%p361) target = $region48
      $region47: #{tpu_custom_call.1} parent=5 // pred_region
        %s365 = ssub.s32 %s27, 1
        %s366 = sand.u32 %s40, 1
        %s367 = scalar_lea.sflag [#allocation3], %s366
        %s368 = sand.u32 %s40, 1
        %s369 = smul.addr %s368, 16
        %s370 = scalar_lea.vmem [#allocation2], %s369
        // Predicated region
        $region49: #{tpu_custom_call.1} parent=47 // pred_check
          %p371 = pneg %p53
        $region50: #{tpu_custom_call.1} parent=47 // pred_check_branch
          %373 = sbr.rel (%p371) target = $region52
        $region51: #{tpu_custom_call.1} parent=47 // pred_region
          %375 = dma.done %s367, 256
        $region52: #{tpu_custom_call.1} parent=47 // pred_fallthru
          _
        // Predicated region
        $region53: #{tpu_custom_call.1} parent=47 // pred_check
          %p376 = pneg %p74
        $region54: #{tpu_custom_call.1} parent=47 // pred_check_branch
          %378 = sbr.rel (%p376) target = $region56
        $region55: #{tpu_custom_call.1} parent=47 // pred_region
          %380 = dma.done [#allocation6], 256
        $region56: #{tpu_custom_call.1} parent=47 // pred_fallthru
          _
        // Predicated region
        $region57: #{tpu_custom_call.1} parent=47 // pred_check
          %p381 = pneg %p116
        $region58: #{tpu_custom_call.1} parent=47 // pred_check_branch
          %383 = sbr.rel (%p381) target = $region60
        $region59: #{tpu_custom_call.1} parent=47 // pred_region
          %385 = dma.done [#allocation6], 3072
        $region60: #{tpu_custom_call.1} parent=47 // pred_fallthru
          _
        // Predicated region
        $region61: #{tpu_custom_call.1} parent=47 // pred_check
          %p386 = pneg %p158
        $region62: #{tpu_custom_call.1} parent=47 // pred_check_branch
          %388 = sbr.rel (%p386) target = $region64
        $region63: #{tpu_custom_call.1} parent=47 // pred_region
          %390 = dma.done [#allocation9], 6144
        $region64: #{tpu_custom_call.1} parent=47 // pred_fallthru
          _
        // Predicated region
        $region65: #{tpu_custom_call.1} parent=47 // pred_check
          %p391 = pneg %p179
        $region66: #{tpu_custom_call.1} parent=47 // pred_check_branch
          %393 = sbr.rel (%p391) target = $region68
        $region67: #{tpu_custom_call.1} parent=47 // pred_region
          %395 = dma.done [#allocation9], 96
        $region68: #{tpu_custom_call.1} parent=47 // pred_fallthru
          _
        %s396 = sand.u32 %s40, 1
        %s397 = scalar_lea.sflag [#allocation3], %s396
        %s398 = sand.u32 %s40, 1
        %s399 = smul.addr %s398, 16
        %s400 = scalar_lea.vmem [#allocation2], %s399
        %p401 = pneg %p53
        %p402 = pneg %p50
        %p403 = pneg %p74
        %p404 = pneg %p71
        %p405 = pneg %p95
        %p406 = pneg %p92
        %p407 = pneg %p116
        %p408 = pneg %p113
        %p409 = pneg %p137
        %p410 = pneg %p134
        %p411 = pneg %p158
        %p412 = pneg %p155
        %p413 = pneg %p179
        %p414 = pneg %p176
        %p415 = pneg %p205
        %p416 = pneg %p202
        %s417 = sand.u32 %s192, 1
        %s418 = scalar_lea.sflag [#allocation4], %s417
        %s419 = sand.u32 %s192, 1
        %s420 = smul.addr %s419, 32
        %s421 = scalar_lea.vmem [#allocation11], %s420
        %p422 = pneg %p231
        %p423 = pneg %p228
        %s424 = sand.u32 %s32, 1
        %s425 = scalar_lea.sflag [#allocation13], %s424
        %s426 = sand.u32 %s218, 1
        %s427 = smul.addr %s426, 32
        %s428 = scalar_lea.vmem [#allocation12], %s427
        %p429 = pneg %p257
        %p430 = pneg %p254
        %s431 = sand.u32 %s32, 1
        %s432 = scalar_lea.sflag [#allocation13], %s431
        %s433 = sand.u32 %s244, 1
        %s434 = smul.addr %s433, 192
        %s435 = scalar_lea.vmem [#allocation14], %s434
        %s436 = smul.u32 2, %s32
        %s437 = smul.u32 2, %s32
        %s438 = smul.u32 2, %s32
        %s439 = smul.u32 2, %s32
        %v441 = vld [vmem:[%s370] sm:$0xf]
        %v442 = vld [vmem:[%s370 + $0x4] sm:$0xf]
        %v443 = vld [vmem:[%s370 + $0x8] sm:$0xf]
        %v444 = vld [vmem:[%s370 + $0xc] sm:$0xf]
        %v445 = vld [vmem:[#allocation5] sm:$0xf]
        %v446 = vld [vmem:[#allocation5 + $0x4] sm:$0xf]
        %v447 = vld [vmem:[#allocation5 + $0x8] sm:$0xf]
        %v448 = vld [vmem:[#allocation5 + $0xc] sm:$0xf]
        %v449 = vld [vmem:[%s2] sm:$0x1]
        %v451 = vperm.slane %v449, 0
        %v457 = vunpack.c.l.b16 %v441
        %v458 = vunpack.c.l.b16 %v442
        %v459 = vunpack.c.l.b16 %v443
        %v460 = vunpack.c.l.b16 %v444
        %v461 = vpack.c.b16 %v458, %v457
        %v462 = vpack.c.b16 %v460, %v459
        %v467 = vunpack.c.l.b16 %v445
        %v468 = vunpack.c.l.b16 %v446
        %v469 = vunpack.c.l.b16 %v447
        %v470 = vunpack.c.l.b16 %v448
        %v471 = vpack.c.b16 %v468, %v467
        %v472 = vpack.c.b16 %v470, %v469
        %vm475 = vcmask 261120
        %v477 = vsel %vm475, %v461, 0
        %v480 = vsel %vm475, %v462, 0
        %482 = vmatpush.bf16.msra.mxu0 0
        %483 = vmatpush.bf16.msra.mxu0 0
        %484 = vmatpush.bf16.msra.mxu0 0
        %485 = vmatpush.bf16.msra.mxu0 0
        %486 = vmatpush.bf16.msra.mxu0 0
        %487 = vmatpush.bf16.msra.mxu0 0
        %488 = vmatpush.bf16.msra.mxu0 %v472
        %489 = vmatpush.bf16.msra.mxu0 %v471
        %490 = vmatmul.bf16.gmra.mxu0 %v477
        %v491 = vpop.f32.mrf.mxu0
        %v492 = vadd.f32 %v451, %v491
        %v493 = vpop.f32.mrf.mxu0
        %v494 = vadd.f32 %v451, %v493
        %495 = vmatmul.bf16.gmra.mxu0 %v480
        %v496 = vpop.f32.mrf.mxu0
        %v497 = vadd.f32 %v451, %v496
        %v498 = vpop.f32.mrf.mxu0
        %v499 = vadd.f32 %v451, %v498
        %500 = vdwg.mxu0
        %v501 = vmax.f32 %v492, 0.0
        %v502 = vmax.f32 %v494, 0.0
        %v503 = vmax.f32 %v497, 0.0
        %v504 = vmax.f32 %v499, 0.0
        %505 = vst [vmem:[%s421] sm:$0xff] %v501
        %506 = vst [vmem:[%s421 + $0x8] sm:$0xff] %v502
        %507 = vst [vmem:[%s421 + $0x10] sm:$0xff] %v503
        %508 = vst [vmem:[%s421 + $0x18] sm:$0xff] %v504
        %vm513 = vcmask 1041408
        %v514 = vrot.slane %v501, 6
        %v515 = vrot.slane %v502, 6
        %v516 = vsel %vm513, %v514, %v515
        %v517 = vrot.slane %v503, 6
        %v518 = vrot.slane %v504, 6
        %v519 = vsel %vm513, %v517, %v518
        %v524 = vsel %vm513, 0.0, %v514
        %v525 = vsel %vm513, 0.0, %v517
        %vm528 = vcmask 1046528
        %v529 = vrot.slane %v524, 1
        %v530 = vrot.slane %v516, 1
        %v531 = vsel %vm528, %v529, %v530
        %v532 = vrot.slane %v515, 1
        %v533 = vsel %vm528, %v530, %v532
        %v534 = vrot.slane %v525, 1
        %v535 = vrot.slane %v519, 1
        %v536 = vsel %vm528, %v534, %v535
        %v537 = vrot.slane %v518, 1
        %v538 = vsel %vm528, %v535, %v537
        %vm543 = vcmask 1045504
        %v544 = vrot.slane %v524, 2
        %v545 = vrot.slane %v516, 2
        %v546 = vsel %vm543, %v544, %v545
        %v547 = vrot.slane %v515, 2
        %v548 = vsel %vm543, %v545, %v547
        %v549 = vrot.slane %v525, 2
        %v550 = vrot.slane %v519, 2
        %v551 = vsel %vm543, %v549, %v550
        %v552 = vrot.slane %v518, 2
        %v553 = vsel %vm543, %v550, %v552
        %v558 = vpack.c.bf16 %v516, %v524
        %v559 = vpack.c.bf16 %v533, %v531
        %v560 = vpack.c.bf16 %v548, %v546
        %v561 = vpack.c.bf16 %v519, %v525
        %v562 = vpack.c.bf16 %v538, %v536
        %v563 = vpack.c.bf16 %v553, %v551
        %v564 = vld [vmem:[#allocation7] sm:$0xf]
        %v565 = vld [vmem:[#allocation7 + $0x4] sm:$0xf]
        %v566 = vld [vmem:[#allocation7 + $0x8] sm:$0xf]
        %v567 = vld [vmem:[#allocation7 + $0xc] sm:$0xf]
        %v568 = vld [vmem:[#allocation7 + $0x10] sm:$0xf]
        %v569 = vld [vmem:[#allocation7 + $0x14] sm:$0xf]
        %v570 = vld [vmem:[#allocation7 + $0x18] sm:$0xf]
        %v571 = vld [vmem:[#allocation7 + $0x1c] sm:$0xf]
        %v572 = vld [vmem:[#allocation7 + $0x20] sm:$0xf]
        %v573 = vld [vmem:[#allocation7 + $0x24] sm:$0xf]
        %v574 = vld [vmem:[#allocation7 + $0x28] sm:$0xf]
        %v575 = vld [vmem:[#allocation7 + $0x2c] sm:$0xf]
        %v576 = vld [vmem:[#allocation7 + $0x30] sm:$0xf]
        %v577 = vld [vmem:[#allocation7 + $0x34] sm:$0xf]
        %v578 = vld [vmem:[#allocation7 + $0x38] sm:$0xf]
        %v579 = vld [vmem:[#allocation7 + $0x3c] sm:$0xf]
        %v580 = vld [vmem:[#allocation7 + $0x40] sm:$0xf]
        %v581 = vld [vmem:[#allocation7 + $0x44] sm:$0xf]
        %v582 = vld [vmem:[#allocation7 + $0x48] sm:$0xf]
        %v583 = vld [vmem:[#allocation7 + $0x4c] sm:$0xf]
        %v584 = vld [vmem:[#allocation7 + $0x50] sm:$0xf]
        %v585 = vld [vmem:[#allocation7 + $0x54] sm:$0xf]
        %v586 = vld [vmem:[#allocation7 + $0x58] sm:$0xf]
        %v587 = vld [vmem:[#allocation7 + $0x5c] sm:$0xf]
        %v588 = vld [vmem:[#allocation7 + $0x60] sm:$0xf]
        %v589 = vld [vmem:[#allocation7 + $0x64] sm:$0xf]
        %v590 = vld [vmem:[#allocation7 + $0x68] sm:$0xf]
        %v591 = vld [vmem:[#allocation7 + $0x6c] sm:$0xf]
        %v592 = vld [vmem:[#allocation7 + $0x70] sm:$0xf]
        %v593 = vld [vmem:[#allocation7 + $0x74] sm:$0xf]
        %v594 = vld [vmem:[#allocation7 + $0x78] sm:$0xf]
        %v595 = vld [vmem:[#allocation7 + $0x7c] sm:$0xf]
        %v596 = vld [vmem:[#allocation7 + $0x80] sm:$0xf]
        %v597 = vld [vmem:[#allocation7 + $0x84] sm:$0xf]
        %v598 = vld [vmem:[#allocation7 + $0x88] sm:$0xf]
        %v599 = vld [vmem:[#allocation7 + $0x8c] sm:$0xf]
        %v600 = vld [vmem:[#allocation7 + $0x90] sm:$0xf]
        %v601 = vld [vmem:[#allocation7 + $0x94] sm:$0xf]
        %v602 = vld [vmem:[#allocation7 + $0x98] sm:$0xf]
        %v603 = vld [vmem:[#allocation7 + $0x9c] sm:$0xf]
        %v604 = vld [vmem:[#allocation7 + $0xa0] sm:$0xf]
        %v605 = vld [vmem:[#allocation7 + $0xa4] sm:$0xf]
        %v606 = vld [vmem:[#allocation7 + $0xa8] sm:$0xf]
        %v607 = vld [vmem:[#allocation7 + $0xac] sm:$0xf]
        %v608 = vld [vmem:[#allocation7 + $0xb0] sm:$0xf]
        %v609 = vld [vmem:[#allocation7 + $0xb4] sm:$0xf]
        %v610 = vld [vmem:[#allocation7 + $0xb8] sm:$0xf]
        %v611 = vld [vmem:[#allocation7 + $0xbc] sm:$0xf]
        %v612 = vld [vmem:[%s4] sm:$0x1]
        %v614 = vperm.slane %v612, 0
        %v664 = vunpack.c.l.b16 %v564
        %v665 = vunpack.c.l.b16 %v565
        %v666 = vunpack.c.l.b16 %v566
        %v667 = vunpack.c.l.b16 %v567
        %v668 = vunpack.c.l.b16 %v568
        %v669 = vunpack.c.l.b16 %v569
        %v670 = vunpack.c.l.b16 %v570
        %v671 = vunpack.c.l.b16 %v571
        %v672 = vunpack.c.l.b16 %v572
        %v673 = vunpack.c.l.b16 %v573
        %v674 = vunpack.c.l.b16 %v574
        %v675 = vunpack.c.l.b16 %v575
        %v676 = vunpack.c.l.b16 %v576
        %v677 = vunpack.c.l.b16 %v577
        %v678 = vunpack.c.l.b16 %v578
        %v679 = vunpack.c.l.b16 %v579
        %v680 = vunpack.c.l.b16 %v580
        %v681 = vunpack.c.l.b16 %v581
        %v682 = vunpack.c.l.b16 %v582
        %v683 = vunpack.c.l.b16 %v583
        %v684 = vunpack.c.l.b16 %v584
        %v685 = vunpack.c.l.b16 %v585
        %v686 = vunpack.c.l.b16 %v586
        %v687 = vunpack.c.l.b16 %v587
        %v688 = vunpack.c.l.b16 %v588
        %v689 = vunpack.c.l.b16 %v589
        %v690 = vunpack.c.l.b16 %v590
        %v691 = vunpack.c.l.b16 %v591
        %v692 = vunpack.c.l.b16 %v592
        %v693 = vunpack.c.l.b16 %v593
        %v694 = vunpack.c.l.b16 %v594
        %v695 = vunpack.c.l.b16 %v595
        %v696 = vunpack.c.l.b16 %v596
        %v697 = vunpack.c.l.b16 %v597
        %v698 = vunpack.c.l.b16 %v598
        %v699 = vunpack.c.l.b16 %v599
        %v700 = vunpack.c.l.b16 %v600
        %v701 = vunpack.c.l.b16 %v601
        %v702 = vunpack.c.l.b16 %v602
        %v703 = vunpack.c.l.b16 %v603
        %v704 = vunpack.c.l.b16 %v604
        %v705 = vunpack.c.l.b16 %v605
        %v706 = vunpack.c.l.b16 %v606
        %v707 = vunpack.c.l.b16 %v607
        %v708 = vunpack.c.l.b16 %v608
        %v709 = vunpack.c.l.b16 %v609
        %v710 = vunpack.c.l.b16 %v610
        %v711 = vunpack.c.l.b16 %v611
        %v712 = vpack.c.b16 %v665, %v664
        %v713 = vpack.c.b16 %v667, %v666
        %v714 = vpack.c.b16 %v669, %v668
        %v715 = vpack.c.b16 %v671, %v670
        %v716 = vpack.c.b16 %v673, %v672
        %v717 = vpack.c.b16 %v675, %v674
        %v718 = vpack.c.b16 %v677, %v676
        %v719 = vpack.c.b16 %v679, %v678
        %v720 = vpack.c.b16 %v681, %v680
        %v721 = vpack.c.b16 %v683, %v682
        %v722 = vpack.c.b16 %v685, %v684
        %v723 = vpack.c.b16 %v687, %v686
        %v724 = vpack.c.b16 %v689, %v688
        %v725 = vpack.c.b16 %v691, %v690
        %v726 = vpack.c.b16 %v693, %v692
        %v727 = vpack.c.b16 %v695, %v694
        %v728 = vpack.c.b16 %v697, %v696
        %v729 = vpack.c.b16 %v699, %v698
        %v730 = vpack.c.b16 %v701, %v700
        %v731 = vpack.c.b16 %v703, %v702
        %v732 = vpack.c.b16 %v705, %v704
        %v733 = vpack.c.b16 %v707, %v706
        %v734 = vpack.c.b16 %v709, %v708
        %v735 = vpack.c.b16 %v711, %v710
        %760 = vmatpush.bf16.msra.mxu0 %v719
        %761 = vmatpush.bf16.msra.mxu0 %v718
        %762 = vmatpush.bf16.msra.mxu0 %v717
        %763 = vmatpush.bf16.msra.mxu0 %v716
        %764 = vmatpush.bf16.msra.mxu0 %v715
        %765 = vmatpush.bf16.msra.mxu0 %v714
        %766 = vmatpush.bf16.msra.mxu0 %v713
        %767 = vmatpush.bf16.msra.mxu0 %v712
        %768 = vmatmul.bf16.gmra.mxu0 %v558
        %v769 = vpop.f32.mrf.mxu0
        %v770 = vadd.f32 %v614, %v769
        %v771 = vpop.f32.mrf.mxu0
        %v772 = vadd.f32 %v614, %v771
        %773 = vmatmul.bf16.gmra.mxu0 %v561
        %v774 = vpop.f32.mrf.mxu0
        %v775 = vadd.f32 %v614, %v774
        %v776 = vpop.f32.mrf.mxu0
        %v777 = vadd.f32 %v614, %v776
        %778 = vdwg.mxu0
        %779 = vmatpush.bf16.msra.mxu0 %v727
        %780 = vmatpush.bf16.msra.mxu0 %v726
        %781 = vmatpush.bf16.msra.mxu0 %v725
        %782 = vmatpush.bf16.msra.mxu0 %v724
        %783 = vmatpush.bf16.msra.mxu0 %v723
        %784 = vmatpush.bf16.msra.mxu0 %v722
        %785 = vmatpush.bf16.msra.mxu0 %v721
        %786 = vmatpush.bf16.msra.mxu0 %v720
        %787 = vmatmul.bf16.gmra.mxu0 %v559
        %v788 = vpop.f32.mrf.mxu0
        %v789 = vadd.f32 %v770, %v788
        %v790 = vpop.f32.mrf.mxu0
        %v791 = vadd.f32 %v772, %v790
        %792 = vmatmul.bf16.gmra.mxu0 %v562
        %v793 = vpop.f32.mrf.mxu0
        %v794 = vadd.f32 %v775, %v793
        %v795 = vpop.f32.mrf.mxu0
        %v796 = vadd.f32 %v777, %v795
        %797 = vdwg.mxu0
        %798 = vmatpush.bf16.msra.mxu0 %v735
        %799 = vmatpush.bf16.msra.mxu0 %v734
        %800 = vmatpush.bf16.msra.mxu0 %v733
        %801 = vmatpush.bf16.msra.mxu0 %v732
        %802 = vmatpush.bf16.msra.mxu0 %v731
        %803 = vmatpush.bf16.msra.mxu0 %v730
        %804 = vmatpush.bf16.msra.mxu0 %v729
        %805 = vmatpush.bf16.msra.mxu0 %v728
        %806 = vmatmul.bf16.gmra.mxu0 %v560
        %v807 = vpop.f32.mrf.mxu0
        %v808 = vadd.f32 %v789, %v807
        %v809 = vpop.f32.mrf.mxu0
        %v810 = vadd.f32 %v791, %v809
        %811 = vmatmul.bf16.gmra.mxu0 %v563
        %v812 = vpop.f32.mrf.mxu0
        %v813 = vadd.f32 %v794, %v812
        %v814 = vpop.f32.mrf.mxu0
        %v815 = vadd.f32 %v796, %v814
        %816 = vdwg.mxu0
        %v817 = vmax.f32 %v808, 0.0
        %v818 = vmax.f32 %v810, 0.0
        %v819 = vmax.f32 %v813, 0.0
        %v820 = vmax.f32 %v815, 0.0
        %821 = vst [vmem:[%s428] sm:$0xff] %v817
        %822 = vst [vmem:[%s428 + $0x8] sm:$0xff] %v818
        %823 = vst [vmem:[%s428 + $0x10] sm:$0xff] %v819
        %824 = vst [vmem:[%s428 + $0x18] sm:$0xff] %v820
        %v825 = vpack.c.bf16 %v818, %v817
        %v826 = vpack.c.bf16 %v820, %v819
        %v827 = vld [vmem:[#allocation8] sm:$0xff]
        %v828 = vld [vmem:[#allocation8 + $0x8] sm:$0xff]
        %v829 = vld [vmem:[#allocation8 + $0x10] sm:$0xff]
        %v830 = vld [vmem:[#allocation8 + $0x18] sm:$0xff]
        %v831 = vld [vmem:[#allocation8 + $0x20] sm:$0xff]
        %v832 = vld [vmem:[#allocation8 + $0x28] sm:$0xff]
        %v833 = vld [vmem:[#allocation8 + $0x30] sm:$0xff]
        %v834 = vld [vmem:[#allocation8 + $0x38] sm:$0xff]
        %v835 = vld [vmem:[#allocation8 + $0x40] sm:$0xff]
        %v836 = vld [vmem:[#allocation8 + $0x48] sm:$0xff]
        %v837 = vld [vmem:[#allocation8 + $0x50] sm:$0xff]
        %v838 = vld [vmem:[#allocation8 + $0x58] sm:$0xff]
        %v839 = vld [vmem:[#allocation8 + $0x60] sm:$0xff]
        %v840 = vld [vmem:[#allocation8 + $0x68] sm:$0xff]
        %v841 = vld [vmem:[#allocation8 + $0x70] sm:$0xff]
        %v842 = vld [vmem:[#allocation8 + $0x78] sm:$0xff]
        %v843 = vld [vmem:[#allocation8 + $0x80] sm:$0xff]
        %v844 = vld [vmem:[#allocation8 + $0x88] sm:$0xff]
        %v845 = vld [vmem:[#allocation8 + $0x90] sm:$0xff]
        %v846 = vld [vmem:[#allocation8 + $0x98] sm:$0xff]
        %v847 = vld [vmem:[#allocation8 + $0xa0] sm:$0xff]
        %v848 = vld [vmem:[#allocation8 + $0xa8] sm:$0xff]
        %v849 = vld [vmem:[#allocation8 + $0xb0] sm:$0xff]
        %v850 = vld [vmem:[#allocation8 + $0xb8] sm:$0xff]
        %v851 = vld [vmem:[#allocation8 + $0xc0] sm:$0xff]
        %v852 = vld [vmem:[#allocation8 + $0xc8] sm:$0xff]
        %v853 = vld [vmem:[#allocation8 + $0xd0] sm:$0xff]
        %v854 = vld [vmem:[#allocation8 + $0xd8] sm:$0xff]
        %v855 = vld [vmem:[#allocation8 + $0xe0] sm:$0xff]
        %v856 = vld [vmem:[#allocation8 + $0xe8] sm:$0xff]
        %v857 = vld [vmem:[#allocation8 + $0xf0] sm:$0xff]
        %v858 = vld [vmem:[#allocation8 + $0xf8] sm:$0xff]
        %v859 = vld [vmem:[#allocation8 + $0x100] sm:$0xff]
        %v860 = vld [vmem:[#allocation8 + $0x108] sm:$0xff]
        %v861 = vld [vmem:[#allocation8 + $0x110] sm:$0xff]
        %v862 = vld [vmem:[#allocation8 + $0x118] sm:$0xff]
        %v863 = vld [vmem:[#allocation8 + $0x120] sm:$0xff]
        %v864 = vld [vmem:[#allocation8 + $0x128] sm:$0xff]
        %v865 = vld [vmem:[#allocation8 + $0x130] sm:$0xff]
        %v866 = vld [vmem:[#allocation8 + $0x138] sm:$0xff]
        %v867 = vld [vmem:[#allocation8 + $0x140] sm:$0xff]
        %v868 = vld [vmem:[#allocation8 + $0x148] sm:$0xff]
        %v869 = vld [vmem:[#allocation8 + $0x150] sm:$0xff]
        %v870 = vld [vmem:[#allocation8 + $0x158] sm:$0xff]
        %v871 = vld [vmem:[#allocation8 + $0x160] sm:$0xff]
        %v872 = vld [vmem:[#allocation8 + $0x168] sm:$0xff]
        %v873 = vld [vmem:[#allocation8 + $0x170] sm:$0xff]
        %v874 = vld [vmem:[#allocation8 + $0x178] sm:$0xff]
        %v875 = vld [vmem:[#allocation10] sm:$0x3f]
        %v877 = vperm.slane %v875, 0
        %v878 = vperm.slane %v875, 1
        %v879 = vperm.slane %v875, 2
        %v880 = vperm.slane %v875, 3
        %v881 = vperm.slane %v875, 4
        %v882 = vperm.slane %v875, 5
        %v937 = vunpack.c.l.b16 %v827
        %v938 = vunpack.c.h.b16 %v827
        %v939 = vunpack.c.l.b16 %v828
        %v940 = vunpack.c.h.b16 %v828
        %v941 = vunpack.c.l.b16 %v829
        %v942 = vunpack.c.h.b16 %v829
        %v943 = vunpack.c.l.b16 %v830
        %v944 = vunpack.c.h.b16 %v830
        %v945 = vunpack.c.l.b16 %v831
        %v946 = vunpack.c.h.b16 %v831
        %v947 = vunpack.c.l.b16 %v832
        %v948 = vunpack.c.h.b16 %v832
        %v949 = vunpack.c.l.b16 %v833
        %v950 = vunpack.c.h.b16 %v833
        %v951 = vunpack.c.l.b16 %v834
        %v952 = vunpack.c.h.b16 %v834
        %v953 = vunpack.c.l.b16 %v835
        %v954 = vunpack.c.h.b16 %v835
        %v955 = vunpack.c.l.b16 %v836
        %v956 = vunpack.c.h.b16 %v836
        %v957 = vunpack.c.l.b16 %v837
        %v958 = vunpack.c.h.b16 %v837
        %v959 = vunpack.c.l.b16 %v838
        %v960 = vunpack.c.h.b16 %v838
        %v961 = vunpack.c.l.b16 %v839
        %v962 = vunpack.c.h.b16 %v839
        %v963 = vunpack.c.l.b16 %v840
        %v964 = vunpack.c.h.b16 %v840
        %v965 = vunpack.c.l.b16 %v841
        %v966 = vunpack.c.h.b16 %v841
        %v967 = vunpack.c.l.b16 %v842
        %v968 = vunpack.c.h.b16 %v842
        %v969 = vunpack.c.l.b16 %v843
        %v970 = vunpack.c.h.b16 %v843
        %v971 = vunpack.c.l.b16 %v844
        %v972 = vunpack.c.h.b16 %v844
        %v973 = vunpack.c.l.b16 %v845
        %v974 = vunpack.c.h.b16 %v845
        %v975 = vunpack.c.l.b16 %v846
        %v976 = vunpack.c.h.b16 %v846
        %v977 = vunpack.c.l.b16 %v847
        %v978 = vunpack.c.h.b16 %v847
        %v979 = vunpack.c.l.b16 %v848
        %v980 = vunpack.c.h.b16 %v848
        %v981 = vunpack.c.l.b16 %v849
        %v982 = vunpack.c.h.b16 %v849
        %v983 = vunpack.c.l.b16 %v850
        %v984 = vunpack.c.h.b16 %v850
        %v985 = vunpack.c.l.b16 %v851
        %v986 = vunpack.c.h.b16 %v851
        %v987 = vunpack.c.l.b16 %v852
        %v988 = vunpack.c.h.b16 %v852
        %v989 = vunpack.c.l.b16 %v853
        %v990 = vunpack.c.h.b16 %v853
        %v991 = vunpack.c.l.b16 %v854
        %v992 = vunpack.c.h.b16 %v854
        %v993 = vunpack.c.l.b16 %v855
        %v994 = vunpack.c.h.b16 %v855
        %v995 = vunpack.c.l.b16 %v856
        %v996 = vunpack.c.h.b16 %v856
        %v997 = vunpack.c.l.b16 %v857
        %v998 = vunpack.c.h.b16 %v857
        %v999 = vunpack.c.l.b16 %v858
        %v1000 = vunpack.c.h.b16 %v858
        %v1001 = vunpack.c.l.b16 %v859
        %v1002 = vunpack.c.h.b16 %v859
        %v1003 = vunpack.c.l.b16 %v860
        %v1004 = vunpack.c.h.b16 %v860
        %v1005 = vunpack.c.l.b16 %v861
        %v1006 = vunpack.c.h.b16 %v861
        %v1007 = vunpack.c.l.b16 %v862
        %v1008 = vunpack.c.h.b16 %v862
        %v1009 = vunpack.c.l.b16 %v863
        %v1010 = vunpack.c.h.b16 %v863
        %v1011 = vunpack.c.l.b16 %v864
        %v1012 = vunpack.c.h.b16 %v864
        %v1013 = vunpack.c.l.b16 %v865
        %v1014 = vunpack.c.h.b16 %v865
        %v1015 = vunpack.c.l.b16 %v866
        %v1016 = vunpack.c.h.b16 %v866
        %v1017 = vunpack.c.l.b16 %v867
        %v1018 = vunpack.c.h.b16 %v867
        %v1019 = vunpack.c.l.b16 %v868
        %v1020 = vunpack.c.h.b16 %v868
        %v1021 = vunpack.c.l.b16 %v869
        %v1022 = vunpack.c.h.b16 %v869
        %v1023 = vunpack.c.l.b16 %v870
        %v1024 = vunpack.c.h.b16 %v870
        %v1025 = vunpack.c.l.b16 %v871
        %v1026 = vunpack.c.h.b16 %v871
        %v1027 = vunpack.c.l.b16 %v872
        %v1028 = vunpack.c.h.b16 %v872
        %v1029 = vunpack.c.l.b16 %v873
        %v1030 = vunpack.c.h.b16 %v873
        %v1031 = vunpack.c.l.b16 %v874
        %v1032 = vunpack.c.h.b16 %v874
        %v1033 = vpack.c.b16 %v943, %v937
        %v1034 = vpack.c.b16 %v944, %v938
        %v1035 = vpack.c.b16 %v945, %v939
        %v1036 = vpack.c.b16 %v946, %v940
        %v1037 = vpack.c.b16 %v947, %v941
        %v1038 = vpack.c.b16 %v948, %v942
        %v1039 = vpack.c.b16 %v955, %v949
        %v1040 = vpack.c.b16 %v956, %v950
        %v1041 = vpack.c.b16 %v957, %v951
        %v1042 = vpack.c.b16 %v958, %v952
        %v1043 = vpack.c.b16 %v959, %v953
        %v1044 = vpack.c.b16 %v960, %v954
        %v1045 = vpack.c.b16 %v967, %v961
        %v1046 = vpack.c.b16 %v968, %v962
        %v1047 = vpack.c.b16 %v969, %v963
        %v1048 = vpack.c.b16 %v970, %v964
        %v1049 = vpack.c.b16 %v971, %v965
        %v1050 = vpack.c.b16 %v972, %v966
        %v1051 = vpack.c.b16 %v979, %v973
        %v1052 = vpack.c.b16 %v980, %v974
        %v1053 = vpack.c.b16 %v981, %v975
        %v1054 = vpack.c.b16 %v982, %v976
        %v1055 = vpack.c.b16 %v983, %v977
        %v1056 = vpack.c.b16 %v984, %v978
        %v1057 = vpack.c.b16 %v991, %v985
        %v1058 = vpack.c.b16 %v992, %v986
        %v1059 = vpack.c.b16 %v993, %v987
        %v1060 = vpack.c.b16 %v994, %v988
        %v1061 = vpack.c.b16 %v995, %v989
        %v1062 = vpack.c.b16 %v996, %v990
        %v1063 = vpack.c.b16 %v1003, %v997
        %v1064 = vpack.c.b16 %v1004, %v998
        %v1065 = vpack.c.b16 %v1005, %v999
        %v1066 = vpack.c.b16 %v1006, %v1000
        %v1067 = vpack.c.b16 %v1007, %v1001
        %v1068 = vpack.c.b16 %v1008, %v1002
        %v1069 = vpack.c.b16 %v1015, %v1009
        %v1070 = vpack.c.b16 %v1016, %v1010
        %v1071 = vpack.c.b16 %v1017, %v1011
        %v1072 = vpack.c.b16 %v1018, %v1012
        %v1073 = vpack.c.b16 %v1019, %v1013
        %v1074 = vpack.c.b16 %v1020, %v1014
        %v1075 = vpack.c.b16 %v1027, %v1021
        %v1076 = vpack.c.b16 %v1028, %v1022
        %v1077 = vpack.c.b16 %v1029, %v1023
        %v1078 = vpack.c.b16 %v1030, %v1024
        %v1079 = vpack.c.b16 %v1031, %v1025
        %v1080 = vpack.c.b16 %v1032, %v1026
        %1129 = vmatpush.bf16.msra.mxu0 %v1075
        %1130 = vmatpush.bf16.msra.mxu0 %v1069
        %1131 = vmatpush.bf16.msra.mxu0 %v1063
        %1132 = vmatpush.bf16.msra.mxu0 %v1057
        %1133 = vmatpush.bf16.msra.mxu0 %v1051
        %1134 = vmatpush.bf16.msra.mxu0 %v1045
        %1135 = vmatpush.bf16.msra.mxu0 %v1039
        %1136 = vmatpush.bf16.msra.mxu0 %v1033
        %1137 = vmatmul.bf16.gmra.mxu0 %v825
        %v1138 = vpop.f32.mrf.mxu0
        %v1139 = vadd.f32 %v877, %v1138
        %v1140 = vpop.f32.mrf.mxu0
        %v1141 = vadd.f32 %v877, %v1140
        %1142 = vmatmul.bf16.gmra.mxu0 %v826
        %v1143 = vpop.f32.mrf.mxu0
        %v1144 = vadd.f32 %v877, %v1143
        %v1145 = vpop.f32.mrf.mxu0
        %v1146 = vadd.f32 %v877, %v1145
        %1147 = vdwg.mxu0
        %1148 = vmatpush.bf16.msra.mxu0 %v1076
        %1149 = vmatpush.bf16.msra.mxu0 %v1070
        %1150 = vmatpush.bf16.msra.mxu0 %v1064
        %1151 = vmatpush.bf16.msra.mxu0 %v1058
        %1152 = vmatpush.bf16.msra.mxu0 %v1052
        %1153 = vmatpush.bf16.msra.mxu0 %v1046
        %1154 = vmatpush.bf16.msra.mxu0 %v1040
        %1155 = vmatpush.bf16.msra.mxu0 %v1034
        %1156 = vmatmul.bf16.gmra.mxu0 %v825
        %v1157 = vpop.f32.mrf.mxu0
        %v1158 = vadd.f32 %v878, %v1157
        %v1159 = vpop.f32.mrf.mxu0
        %v1160 = vadd.f32 %v878, %v1159
        %1161 = vmatmul.bf16.gmra.mxu0 %v826
        %v1162 = vpop.f32.mrf.mxu0
        %v1163 = vadd.f32 %v878, %v1162
        %v1164 = vpop.f32.mrf.mxu0
        %v1165 = vadd.f32 %v878, %v1164
        %1166 = vdwg.mxu0
        %1167 = vmatpush.bf16.msra.mxu0 %v1077
        %1168 = vmatpush.bf16.msra.mxu0 %v1071
        %1169 = vmatpush.bf16.msra.mxu0 %v1065
        %1170 = vmatpush.bf16.msra.mxu0 %v1059
        %1171 = vmatpush.bf16.msra.mxu0 %v1053
        %1172 = vmatpush.bf16.msra.mxu0 %v1047
        %1173 = vmatpush.bf16.msra.mxu0 %v1041
        %1174 = vmatpush.bf16.msra.mxu0 %v1035
        %1175 = vmatmul.bf16.gmra.mxu0 %v825
        %v1176 = vpop.f32.mrf.mxu0
        %v1177 = vadd.f32 %v879, %v1176
        %v1178 = vpop.f32.mrf.mxu0
        %v1179 = vadd.f32 %v879, %v1178
        %1180 = vmatmul.bf16.gmra.mxu0 %v826
        %v1181 = vpop.f32.mrf.mxu0
        %v1182 = vadd.f32 %v879, %v1181
        %v1183 = vpop.f32.mrf.mxu0
        %v1184 = vadd.f32 %v879, %v1183
        %1185 = vdwg.mxu0
        %1186 = vmatpush.bf16.msra.mxu0 %v1078
        %1187 = vmatpush.bf16.msra.mxu0 %v1072
        %1188 = vmatpush.bf16.msra.mxu0 %v1066
        %1189 = vmatpush.bf16.msra.mxu0 %v1060
        %1190 = vmatpush.bf16.msra.mxu0 %v1054
        %1191 = vmatpush.bf16.msra.mxu0 %v1048
        %1192 = vmatpush.bf16.msra.mxu0 %v1042
        %1193 = vmatpush.bf16.msra.mxu0 %v1036
        %1194 = vmatmul.bf16.gmra.mxu0 %v825
        %v1195 = vpop.f32.mrf.mxu0
        %v1196 = vadd.f32 %v880, %v1195
        %v1197 = vpop.f32.mrf.mxu0
        %v1198 = vadd.f32 %v880, %v1197
        %1199 = vmatmul.bf16.gmra.mxu0 %v826
        %v1200 = vpop.f32.mrf.mxu0
        %v1201 = vadd.f32 %v880, %v1200
        %v1202 = vpop.f32.mrf.mxu0
        %v1203 = vadd.f32 %v880, %v1202
        %1204 = vdwg.mxu0
        %1205 = vmatpush.bf16.msra.mxu0 %v1079
        %1206 = vmatpush.bf16.msra.mxu0 %v1073
        %1207 = vmatpush.bf16.msra.mxu0 %v1067
        %1208 = vmatpush.bf16.msra.mxu0 %v1061
        %1209 = vmatpush.bf16.msra.mxu0 %v1055
        %1210 = vmatpush.bf16.msra.mxu0 %v1049
        %1211 = vmatpush.bf16.msra.mxu0 %v1043
        %1212 = vmatpush.bf16.msra.mxu0 %v1037
        %1213 = vmatmul.bf16.gmra.mxu0 %v825
        %v1214 = vpop.f32.mrf.mxu0
        %v1215 = vadd.f32 %v881, %v1214
        %v1216 = vpop.f32.mrf.mxu0
        %v1217 = vadd.f32 %v881, %v1216
        %1218 = vmatmul.bf16.gmra.mxu0 %v826
        %v1219 = vpop.f32.mrf.mxu0
        %v1220 = vadd.f32 %v881, %v1219
        %v1221 = vpop.f32.mrf.mxu0
        %v1222 = vadd.f32 %v881, %v1221
        %1223 = vdwg.mxu0
        %1224 = vmatpush.bf16.msra.mxu0 %v1080
        %1225 = vmatpush.bf16.msra.mxu0 %v1074
        %1226 = vmatpush.bf16.msra.mxu0 %v1068
        %1227 = vmatpush.bf16.msra.mxu0 %v1062
        %1228 = vmatpush.bf16.msra.mxu0 %v1056
        %1229 = vmatpush.bf16.msra.mxu0 %v1050
        %1230 = vmatpush.bf16.msra.mxu0 %v1044
        %1231 = vmatpush.bf16.msra.mxu0 %v1038
        %1232 = vmatmul.bf16.gmra.mxu0 %v825
        %v1233 = vpop.f32.mrf.mxu0
        %v1234 = vadd.f32 %v882, %v1233
        %v1235 = vpop.f32.mrf.mxu0
        %v1236 = vadd.f32 %v882, %v1235
        %1237 = vmatmul.bf16.gmra.mxu0 %v826
        %v1238 = vpop.f32.mrf.mxu0
        %v1239 = vadd.f32 %v882, %v1238
        %v1240 = vpop.f32.mrf.mxu0
        %v1241 = vadd.f32 %v882, %v1240
        %1242 = vdwg.mxu0
        %1243 = vmax.xlane.f32.xlu0 %v1139
        %v1244 = vpop.xlane.xlu0 %1243
        %1245 = vmax.xlane.f32.xlu0 %v1141
        %v1246 = vpop.xlane.xlu0 %1245
        %1247 = vmax.xlane.f32.xlu0 %v1144
        %v1248 = vpop.xlane.xlu0 %1247
        %1249 = vmax.xlane.f32.xlu0 %v1146
        %v1250 = vpop.xlane.xlu0 %1249
        %v1251 = vsub.f32 %v1139, %v1244
        %v1252 = vsub.f32 %v1141, %v1246
        %v1253 = vsub.f32 %v1144, %v1248
        %v1254 = vsub.f32 %v1146, %v1250
        %v1255 = vmul.f32 %v1251, 1.442695
        %v1256 = vpow.pop %v1255
        %v1257 = vmul.f32 %v1252, 1.442695
        %v1258 = vpow.pop %v1257
        %v1259 = vmul.f32 %v1253, 1.442695
        %v1260 = vpow.pop %v1259
        %v1261 = vmul.f32 %v1254, 1.442695
        %v1262 = vpow.pop %v1261
        %1263 = vadd.xlane.f32.xlu0 %v1256
        %v1264 = vpop.xlane.xlu0 %1263
        %1265 = vadd.xlane.f32.xlu0 %v1258
        %v1266 = vpop.xlane.xlu0 %1265
        %1267 = vadd.xlane.f32.xlu0 %v1260
        %v1268 = vpop.xlane.xlu0 %1267
        %1269 = vadd.xlane.f32.xlu0 %v1262
        %v1270 = vpop.xlane.xlu0 %1269
        %v1271 = vrcp.pop %v1264
        %v1272 = vrcp.pop %v1266
        %v1273 = vrcp.pop %v1268
        %v1274 = vrcp.pop %v1270
        %v1275 = vmul.f32 %v1256, %v1271
        %v1276 = vmul.f32 %v1258, %v1272
        %v1277 = vmul.f32 %v1260, %v1273
        %v1278 = vmul.f32 %v1262, %v1274
        %1279 = vmax.xlane.f32.xlu0 %v1158
        %v1280 = vpop.xlane.xlu0 %1279
        %1281 = vmax.xlane.f32.xlu0 %v1160
        %v1282 = vpop.xlane.xlu0 %1281
        %1283 = vmax.xlane.f32.xlu0 %v1163
        %v1284 = vpop.xlane.xlu0 %1283
        %1285 = vmax.xlane.f32.xlu0 %v1165
        %v1286 = vpop.xlane.xlu0 %1285
        %v1287 = vsub.f32 %v1158, %v1280
        %v1288 = vsub.f32 %v1160, %v1282
        %v1289 = vsub.f32 %v1163, %v1284
        %v1290 = vsub.f32 %v1165, %v1286
        %v1291 = vmul.f32 %v1287, 1.442695
        %v1292 = vpow.pop %v1291
        %v1293 = vmul.f32 %v1288, 1.442695
        %v1294 = vpow.pop %v1293
        %v1295 = vmul.f32 %v1289, 1.442695
        %v1296 = vpow.pop %v1295
        %v1297 = vmul.f32 %v1290, 1.442695
        %v1298 = vpow.pop %v1297
        %1299 = vadd.xlane.f32.xlu0 %v1292
        %v1300 = vpop.xlane.xlu0 %1299
        %1301 = vadd.xlane.f32.xlu0 %v1294
        %v1302 = vpop.xlane.xlu0 %1301
        %1303 = vadd.xlane.f32.xlu0 %v1296
        %v1304 = vpop.xlane.xlu0 %1303
        %1305 = vadd.xlane.f32.xlu0 %v1298
        %v1306 = vpop.xlane.xlu0 %1305
        %v1307 = vrcp.pop %v1300
        %v1308 = vrcp.pop %v1302
        %v1309 = vrcp.pop %v1304
        %v1310 = vrcp.pop %v1306
        %v1311 = vmul.f32 %v1292, %v1307
        %v1312 = vmul.f32 %v1294, %v1308
        %v1313 = vmul.f32 %v1296, %v1309
        %v1314 = vmul.f32 %v1298, %v1310
        %1315 = vmax.xlane.f32.xlu0 %v1177
        %v1316 = vpop.xlane.xlu0 %1315
        %1317 = vmax.xlane.f32.xlu0 %v1179
        %v1318 = vpop.xlane.xlu0 %1317
        %1319 = vmax.xlane.f32.xlu0 %v1182
        %v1320 = vpop.xlane.xlu0 %1319
        %1321 = vmax.xlane.f32.xlu0 %v1184
        %v1322 = vpop.xlane.xlu0 %1321
        %v1323 = vsub.f32 %v1177, %v1316
        %v1324 = vsub.f32 %v1179, %v1318
        %v1325 = vsub.f32 %v1182, %v1320
        %v1326 = vsub.f32 %v1184, %v1322
        %v1327 = vmul.f32 %v1323, 1.442695
        %v1328 = vpow.pop %v1327
        %v1329 = vmul.f32 %v1324, 1.442695
        %v1330 = vpow.pop %v1329
        %v1331 = vmul.f32 %v1325, 1.442695
        %v1332 = vpow.pop %v1331
        %v1333 = vmul.f32 %v1326, 1.442695
        %v1334 = vpow.pop %v1333
        %1335 = vadd.xlane.f32.xlu0 %v1328
        %v1336 = vpop.xlane.xlu0 %1335
        %1337 = vadd.xlane.f32.xlu0 %v1330
        %v1338 = vpop.xlane.xlu0 %1337
        %1339 = vadd.xlane.f32.xlu0 %v1332
        %v1340 = vpop.xlane.xlu0 %1339
        %1341 = vadd.xlane.f32.xlu0 %v1334
        %v1342 = vpop.xlane.xlu0 %1341
        %v1343 = vrcp.pop %v1336
        %v1344 = vrcp.pop %v1338
        %v1345 = vrcp.pop %v1340
        %v1346 = vrcp.pop %v1342
        %v1347 = vmul.f32 %v1328, %v1343
        %v1348 = vmul.f32 %v1330, %v1344
        %v1349 = vmul.f32 %v1332, %v1345
        %v1350 = vmul.f32 %v1334, %v1346
        %1351 = vmax.xlane.f32.xlu0 %v1196
        %v1352 = vpop.xlane.xlu0 %1351
        %1353 = vmax.xlane.f32.xlu0 %v1198
        %v1354 = vpop.xlane.xlu0 %1353
        %1355 = vmax.xlane.f32.xlu0 %v1201
        %v1356 = vpop.xlane.xlu0 %1355
        %1357 = vmax.xlane.f32.xlu0 %v1203
        %v1358 = vpop.xlane.xlu0 %1357
        %v1359 = vsub.f32 %v1196, %v1352
        %v1360 = vsub.f32 %v1198, %v1354
        %v1361 = vsub.f32 %v1201, %v1356
        %v1362 = vsub.f32 %v1203, %v1358
        %v1363 = vmul.f32 %v1359, 1.442695
        %v1364 = vpow.pop %v1363
        %v1365 = vmul.f32 %v1360, 1.442695
        %v1366 = vpow.pop %v1365
        %v1367 = vmul.f32 %v1361, 1.442695
        %v1368 = vpow.pop %v1367
        %v1369 = vmul.f32 %v1362, 1.442695
        %v1370 = vpow.pop %v1369
        %1371 = vadd.xlane.f32.xlu0 %v1364
        %v1372 = vpop.xlane.xlu0 %1371
        %1373 = vadd.xlane.f32.xlu0 %v1366
        %v1374 = vpop.xlane.xlu0 %1373
        %1375 = vadd.xlane.f32.xlu0 %v1368
        %v1376 = vpop.xlane.xlu0 %1375
        %1377 = vadd.xlane.f32.xlu0 %v1370
        %v1378 = vpop.xlane.xlu0 %1377
        %v1379 = vrcp.pop %v1372
        %v1380 = vrcp.pop %v1374
        %v1381 = vrcp.pop %v1376
        %v1382 = vrcp.pop %v1378
        %v1383 = vmul.f32 %v1364, %v1379
        %v1384 = vmul.f32 %v1366, %v1380
        %v1385 = vmul.f32 %v1368, %v1381
        %v1386 = vmul.f32 %v1370, %v1382
        %1387 = vmax.xlane.f32.xlu0 %v1215
        %v1388 = vpop.xlane.xlu0 %1387
        %1389 = vmax.xlane.f32.xlu0 %v1217
        %v1390 = vpop.xlane.xlu0 %1389
        %1391 = vmax.xlane.f32.xlu0 %v1220
        %v1392 = vpop.xlane.xlu0 %1391
        %1393 = vmax.xlane.f32.xlu0 %v1222
        %v1394 = vpop.xlane.xlu0 %1393
        %v1395 = vsub.f32 %v1215, %v1388
        %v1396 = vsub.f32 %v1217, %v1390
        %v1397 = vsub.f32 %v1220, %v1392
        %v1398 = vsub.f32 %v1222, %v1394
        %v1399 = vmul.f32 %v1395, 1.442695
        %v1400 = vpow.pop %v1399
        %v1401 = vmul.f32 %v1396, 1.442695
        %v1402 = vpow.pop %v1401
        %v1403 = vmul.f32 %v1397, 1.442695
        %v1404 = vpow.pop %v1403
        %v1405 = vmul.f32 %v1398, 1.442695
        %v1406 = vpow.pop %v1405
        %1407 = vadd.xlane.f32.xlu0 %v1400
        %v1408 = vpop.xlane.xlu0 %1407
        %1409 = vadd.xlane.f32.xlu0 %v1402
        %v1410 = vpop.xlane.xlu0 %1409
        %1411 = vadd.xlane.f32.xlu0 %v1404
        %v1412 = vpop.xlane.xlu0 %1411
        %1413 = vadd.xlane.f32.xlu0 %v1406
        %v1414 = vpop.xlane.xlu0 %1413
        %v1415 = vrcp.pop %v1408
        %v1416 = vrcp.pop %v1410
        %v1417 = vrcp.pop %v1412
        %v1418 = vrcp.pop %v1414
        %v1419 = vmul.f32 %v1400, %v1415
        %v1420 = vmul.f32 %v1402, %v1416
        %v1421 = vmul.f32 %v1404, %v1417
        %v1422 = vmul.f32 %v1406, %v1418
        %1423 = vmax.xlane.f32.xlu0 %v1234
        %v1424 = vpop.xlane.xlu0 %1423
        %1425 = vmax.xlane.f32.xlu0 %v1236
        %v1426 = vpop.xlane.xlu0 %1425
        %1427 = vmax.xlane.f32.xlu0 %v1239
        %v1428 = vpop.xlane.xlu0 %1427
        %1429 = vmax.xlane.f32.xlu0 %v1241
        %v1430 = vpop.xlane.xlu0 %1429
        %v1431 = vsub.f32 %v1234, %v1424
        %v1432 = vsub.f32 %v1236, %v1426
        %v1433 = vsub.f32 %v1239, %v1428
        %v1434 = vsub.f32 %v1241, %v1430
        %v1435 = vmul.f32 %v1431, 1.442695
        %v1436 = vpow.pop %v1435
        %v1437 = vmul.f32 %v1432, 1.442695
        %v1438 = vpow.pop %v1437
        %v1439 = vmul.f32 %v1433, 1.442695
        %v1440 = vpow.pop %v1439
        %v1441 = vmul.f32 %v1434, 1.442695
        %v1442 = vpow.pop %v1441
        %1443 = vadd.xlane.f32.xlu0 %v1436
        %v1444 = vpop.xlane.xlu0 %1443
        %1445 = vadd.xlane.f32.xlu0 %v1438
        %v1446 = vpop.xlane.xlu0 %1445
        %1447 = vadd.xlane.f32.xlu0 %v1440
        %v1448 = vpop.xlane.xlu0 %1447
        %1449 = vadd.xlane.f32.xlu0 %v1442
        %v1450 = vpop.xlane.xlu0 %1449
        %v1451 = vrcp.pop %v1444
        %v1452 = vrcp.pop %v1446
        %v1453 = vrcp.pop %v1448
        %v1454 = vrcp.pop %v1450
        %v1455 = vmul.f32 %v1436, %v1451
        %v1456 = vmul.f32 %v1438, %v1452
        %v1457 = vmul.f32 %v1440, %v1453
        %v1458 = vmul.f32 %v1442, %v1454
        %1459 = vst [vmem:[%s435] sm:$0xff] %v1275
        %1460 = vst [vmem:[%s435 + $0x8] sm:$0xff] %v1311
        %1461 = vst [vmem:[%s435 + $0x10] sm:$0xff] %v1347
        %1462 = vst [vmem:[%s435 + $0x18] sm:$0xff] %v1383
        %1463 = vst [vmem:[%s435 + $0x20] sm:$0xff] %v1419
        %1464 = vst [vmem:[%s435 + $0x28] sm:$0xff] %v1455
        %1465 = vst [vmem:[%s435 + $0x30] sm:$0xff] %v1276
        %1466 = vst [vmem:[%s435 + $0x38] sm:$0xff] %v1312
        %1467 = vst [vmem:[%s435 + $0x40] sm:$0xff] %v1348
        %1468 = vst [vmem:[%s435 + $0x48] sm:$0xff] %v1384
        %1469 = vst [vmem:[%s435 + $0x50] sm:$0xff] %v1420
        %1470 = vst [vmem:[%s435 + $0x58] sm:$0xff] %v1456
        %1471 = vst [vmem:[%s435 + $0x60] sm:$0xff] %v1277
        %1472 = vst [vmem:[%s435 + $0x68] sm:$0xff] %v1313
        %1473 = vst [vmem:[%s435 + $0x70] sm:$0xff] %v1349
        %1474 = vst [vmem:[%s435 + $0x78] sm:$0xff] %v1385
        %1475 = vst [vmem:[%s435 + $0x80] sm:$0xff] %v1421
        %1476 = vst [vmem:[%s435 + $0x88] sm:$0xff] %v1457
        %1477 = vst [vmem:[%s435 + $0x90] sm:$0xff] %v1278
        %1478 = vst [vmem:[%s435 + $0x98] sm:$0xff] %v1314
        %1479 = vst [vmem:[%s435 + $0xa0] sm:$0xff] %v1350
        %1480 = vst [vmem:[%s435 + $0xa8] sm:$0xff] %v1386
        %1481 = vst [vmem:[%s435 + $0xb0] sm:$0xff] %v1422
        %1482 = vst [vmem:[%s435 + $0xb8] sm:$0xff] %v1458
        %s1483 = sand.u32 %s192, 1
        %s1484 = scalar_lea.sflag [#allocation4], %s1483
        %s1485 = sand.u32 %s192, 1
        %s1486 = smul.addr %s1485, 32
        %s1487 = scalar_lea.vmem [#allocation11], %s1486
        %s1488 = sand.u32 %s32, 1
        %s1489 = scalar_lea.sflag [#allocation13], %s1488
        %s1490 = sand.u32 %s218, 1
        %s1491 = smul.addr %s1490, 32
        %s1492 = scalar_lea.vmem [#allocation12], %s1491
        %s1493 = sand.u32 %s32, 1
        %s1494 = scalar_lea.sflag [#allocation13], %s1493
        %s1495 = sand.u32 %s244, 1
        %s1496 = smul.addr %s1495, 192
        %s1497 = scalar_lea.vmem [#allocation14], %s1496
        // Predicated region
        $region69: #{tpu_custom_call.1} parent=47 // pred_check
          %p1498 = pneg %p202
        $region70: #{tpu_custom_call.1} parent=47 // pred_check_branch
          %1500 = sbr.rel (%p1498) target = $region72
        $region71: #{tpu_custom_call.1} parent=47 // pred_region
          %s1501 = smul.u32 2, %s32
          %1503 = vsyncadd %s1484, 0
          %s1504 = smul.addr %s1501, 2
          %s1505 = smul.addr %s1504, 8
          %s1506 = scalar_lea.hbm %s7, %s1505
          %s1507 = sshll.u32 %s1487, 4
          %s1508 = int_to_ptr.vmem [resolvable:$true] %s1507
          %s1509 = sshll.u32 %s1506, 4
          %s1510 = int_to_ptr.hbm [resolvable:$true] %s1509
          %1515 = dma.vmem_to_hbm [thread:$0]  %s1508, 512, %s1510, %s1484, 128, 128, 8
        $region72: #{tpu_custom_call.1} parent=47 // pred_fallthru
          _
        // Predicated region
        $region73: #{tpu_custom_call.1} parent=47 // pred_check
          %p1516 = pneg %p228
        $region74: #{tpu_custom_call.1} parent=47 // pred_check_branch
          %1518 = sbr.rel (%p1516) target = $region76
        $region75: #{tpu_custom_call.1} parent=47 // pred_region
          %s1519 = smul.u32 2, %s32
          %1521 = vsyncadd %s1489, 0
          %s1522 = smul.addr %s1519, 2
          %s1523 = smul.addr %s1522, 8
          %s1524 = scalar_lea.hbm %s8, %s1523
          %s1525 = sshll.u32 %s1492, 4
          %s1526 = int_to_ptr.vmem [resolvable:$true] %s1525
          %s1527 = sshll.u32 %s1524, 4
          %s1528 = int_to_ptr.hbm [resolvable:$true] %s1527
          %1533 = dma.vmem_to_hbm [thread:$0]  %s1526, 512, %s1528, %s1489, 128, 128, 8
        $region76: #{tpu_custom_call.1} parent=47 // pred_fallthru
          _
        // Predicated region
        $region77: #{tpu_custom_call.1} parent=47 // pred_check
          %p1534 = pneg %p254
        $region78: #{tpu_custom_call.1} parent=47 // pred_check_branch
          %1536 = sbr.rel (%p1534) target = $region80
        $region79: #{tpu_custom_call.1} parent=47 // pred_region
          %s1537 = smul.u32 2, %s32
          %1539 = vsyncadd %s1494, 0
          %s1540 = smul.addr %s1537, 12
          %s1541 = smul.addr %s1540, 8
          %s1542 = scalar_lea.hbm %s9, %s1541
          %s1543 = sshll.u32 %s1497, 4
          %s1544 = int_to_ptr.vmem [resolvable:$true] %s1543
          %s1545 = sshll.u32 %s1542, 4
          %s1546 = int_to_ptr.hbm [resolvable:$true] %s1545
          %1551 = dma.vmem_to_hbm [thread:$0]  %s1544, 3072, %s1546, %s1494, 768, 768, 48
        $region80: #{tpu_custom_call.1} parent=47 // pred_fallthru
          _
      $region48: #{tpu_custom_call.1} parent=5 // pred_fallthru
        _
      %p1552 = scmp.le.s32.totalorder 2, %s27
      // Predicated region
      $region81: #{tpu_custom_call.1} parent=5 // pred_check
        %p1553 = pneg %p1552
      $region82: #{tpu_custom_call.1} parent=5 // pred_check_branch
        %1555 = sbr.rel (%p1553) target = $region84
      $region83: #{tpu_custom_call.1} parent=5 // pred_region
        %s1556 = ssub.s32 %s27, 2
        // Predicated region
        $region85: #{tpu_custom_call.1} parent=83 // pred_check
          %p1557 = pneg %p208
        $region86: #{tpu_custom_call.1} parent=83 // pred_check_branch
          %1559 = sbr.rel (%p1557) target = $region88
        $region87: #{tpu_custom_call.1} parent=83 // pred_region
          %s1560 = sand.u32 %s193, 1
          %s1561 = scalar_lea.sflag [#allocation4], %s1560
          %s1562 = sand.u32 %s193, 1
          %s1563 = smul.addr %s1562, 32
          %s1564 = scalar_lea.vmem [#allocation11], %s1563
          %1566 = dma.done %s1561, 512
        $region88: #{tpu_custom_call.1} parent=83 // pred_fallthru
          _
        // Predicated region
        $region89: #{tpu_custom_call.1} parent=83 // pred_check
          %p1567 = pneg %p234
        $region90: #{tpu_custom_call.1} parent=83 // pred_check_branch
          %1569 = sbr.rel (%p1567) target = $region92
        $region91: #{tpu_custom_call.1} parent=83 // pred_region
          %s1570 = sand.u32 %s33, 1
          %s1571 = scalar_lea.sflag [#allocation13], %s1570
          %s1572 = sand.u32 %s219, 1
          %s1573 = smul.addr %s1572, 32
          %s1574 = scalar_lea.vmem [#allocation12], %s1573
          %1576 = dma.done %s1571, 512
        $region92: #{tpu_custom_call.1} parent=83 // pred_fallthru
          _
        // Predicated region
        $region93: #{tpu_custom_call.1} parent=83 // pred_check
          %p1577 = pneg %p260
        $region94: #{tpu_custom_call.1} parent=83 // pred_check_branch
          %1579 = sbr.rel (%p1577) target = $region96
        $region95: #{tpu_custom_call.1} parent=83 // pred_region
          %s1580 = sand.u32 %s33, 1
          %s1581 = scalar_lea.sflag [#allocation13], %s1580
          %s1582 = sand.u32 %s245, 1
          %s1583 = smul.addr %s1582, 192
          %s1584 = scalar_lea.vmem [#allocation14], %s1583
          %1586 = dma.done %s1581, 3072
        $region96: #{tpu_custom_call.1} parent=83 // pred_fallthru
          _
      $region84: #{tpu_custom_call.1} parent=5 // pred_fallthru
        _
    $region6: #{tpu_custom_call.1} parent=1 // loop_footer
      %s31 = sadd.s32 1, %s27
    $region7: #{tpu_custom_call.1} parent=1 // loop_footer_branch
      %26 = sbr.rel target = $region3
    $region8: #{tpu_custom_call.1} parent=1 // loop_exit
      _
    %1587 = vsyncpa [#allocation3], 1
    %s1588 = scalar_lea.sflag [#allocation3], 1
    %1589 = vsyncpa %s1588, 1
    %1590 = vsyncpa [#allocation6], 1
    %1591 = vsyncpa [#allocation9], 1
    %1592 = vsyncpa [#allocation4], 1
    %s1593 = scalar_lea.sflag [#allocation4], 1
    %1594 = vsyncpa %s1593, 1
    %1595 = vsyncpa [#allocation13], 1
    %s1596 = scalar_lea.sflag [#allocation13], 1
    %1597 = vsyncpa %s1596, 1

</llo_original>
